<compile_context>
chip_gen: v5e
topology: v5e:2x2
jax: 0.10.0
libtpu: 0.0.40
codegen_flags: <defaults>
</compile_context>

<pallas_src>
import functools

import jax
import jax.numpy as jnp
from jax.experimental import pallas as pl
from jax.experimental.pallas import tpu as pltpu

CONV_OUT = 64
LANE = 128


def _round_up(n, m):
    return ((n + m - 1) // m) * m


def slab_layout(F, H):
    """Row layout of the single bf16 weight slab (width 2 * 4*H lanes)."""
    kc = _round_up(3 * F, 16)                 # conv im2col contraction dim (16-row aligned)
    names = ("wc", "wih0", "wrec", "fc1", "fc2")
    rows = {"wc": kc, "wih0": CONV_OUT, "wrec": 2 * H,
            "fc1": _round_up(H, 16), "fc2": LANE}
    off, o = {}, 0
    for n in names:
        off[n] = o
        o += rows[n]
    return {"kc": kc, "rows": rows, "off": off, "total": o}


def make_cnn_lstm_kernel(T, F, H, SUB, layout):
    G = 4 * H            # per-layer gate width (== LANE for H == 32)
    H2 = 2 * H           # fused [layer0 | layer1] state width
    G2 = 2 * G           # fused gate width (both layers)
    KC = layout["kc"]
    off = layout["off"]

    def kernel(xi_ref, w_ref, vp_ref, out_ref):
        # xi_ref : ((T+1)*SUB, KC)      bf16  time-major im2col (+1 zero step, batch padded)
        # w_ref  : (layout.total, G2)   bf16  packed weight slab
        # vp_ref : (8, G2)              f32   packed bias / BN vectors
        # out_ref: (SUB, LANE)          f32   lane-dense output

        vp = vp_ref[...]
        conv_b = vp[0, :CONV_OUT]
        bias_all = vp[1]                      # b_ih0+b_hh0 / b_ih1+b_hh1, gate-interleaved
        fc1_b = vp[2, :LANE]
        bn_g = vp[3, :LANE]
        bn_b = vp[4, :LANE]
        bn_m = vp[5, :LANE]
        bn_v = vp[6, :LANE]
        fc2_b = vp[7, :LANE]

        # static, sublane-aligned views into the weight slab
        wc = w_ref[off["wc"]:off["wc"] + KC, :CONV_OUT]             # (KC, 64)
        wih0 = w_ref[off["wih0"]:off["wih0"] + CONV_OUT, :]         # (64, 2G)
        wrec = w_ref[off["wrec"]:off["wrec"] + H2, :]               # (2H, 2G)
        fc1w = w_ref[off["fc1"]:off["fc1"] + H, :LANE]              # (H, 128)
        fc2w = w_ref[off["fc2"]:off["fc2"] + LANE, :LANE]           # (128, 128)

        # ---- Conv1d(kernel=3, padding='same') as ONE im2col matmul + ReLU ----
        conv = jnp.dot(xi_ref[...], wc, preferred_element_type=jnp.float32)
        conv = jnp.maximum(conv + conv_b, 0.0)                      # ((T+1)*SUB, 64)
        # dropout_conv: identity in eval mode

        # ---- hoisted layer-0 input projection; both layers' biases folded in ----
        # wih0's layer-1 columns are zero, so layer-1 lanes of gx carry exactly bias1.
        gx = jnp.dot(conv.astype(jnp.bfloat16), wih0,
                     preferred_element_type=jnp.float32) + bias_all  # ((T+1)*SUB, 2G)

        # mask that keeps only layer-0 lanes of the fused state (used once, at s == 0)
        l0mask = (jax.lax.broadcasted_iota(jnp.int32, (1, H2), 1) < H).astype(jnp.float32)

        h = jnp.zeros((SUB, H2), jnp.float32)     # [h0 | h1]
        c = jnp.zeros((SUB, H2), jnp.float32)     # [c0 | c1]

        # ---- two-layer LSTM wavefront, both layers fused per step ----
        # Step s: layer 0 consumes timestep s (gx block s); layer 1 consumes timestep s-1,
        # its input being h0 from the state ENTERING this step. Step 0 has no layer-1 work
        # (masked off); step T has no layer-0 work (those lanes read the zero-padded gx
        # block and the resulting h0/c0 are never used).
        # TODO(synk): for T > 16 switch this static unroll to lax.fori_loop carrying (h, c).
        for s in range(T + 1):
            gx_s = gx[s * SUB:(s + 1) * SUB]                        # tile-aligned static slice
            if s == 0:
                gates = gx_s                                        # state is all-zero
            else:
                gates = gx_s + jnp.dot(h.astype(jnp.bfloat16), wrec,
                                       preferred_element_type=jnp.float32)
            sg = jax.nn.sigmoid(gates)
            i_g = sg[:, 0 * H2:1 * H2]
            f_g = sg[:, 1 * H2:2 * H2]
            o_g = sg[:, 3 * H2:4 * H2]
            g_g = jnp.tanh(gates[:, 2 * H2:3 * H2])
            c = f_g * c + i_g * g_g
            h = o_g * jnp.tanh(c)
            if s == 0:                       # suppress the spurious layer-1 update at step 0
                h = h * l0mask
                c = c * l0mask
        # inter-layer LSTM dropout: identity in eval mode

        last = h[:, H:H2]                    # layer-1 hidden at final timestep == lstm_out[:, -1]

        # ---- fc1 -> BatchNorm1d(eval) -> ReLU -> fc2 (all lane-padded to 128) ----
        z = jnp.dot(last.astype(jnp.bfloat16), fc1w,
                    preferred_element_type=jnp.float32) + fc1_b
        z = (z - bn_m) * jax.lax.rsqrt(bn_v + 1e-5) * bn_g + bn_b
        z = jnp.maximum(z, 0.0)
        # dropout_fc: identity in eval mode
        out = jnp.dot(z.astype(jnp.bfloat16), fc2w,
                      preferred_element_type=jnp.float32) + fc2_b
        out_ref[...] = out

    return kernel


def _build_im2col(x, SUB, KC):
    """Wrapper-side im2col: time-major, one extra zero timestep block (for the wavefront's
    final step), batch padded to SUB sublanes so every in-kernel slice is tile-aligned."""
    B, T, F = x.shape
    xp = jnp.pad(x, ((0, 0), (1, 1), (0, 0)))                                # 'same' padding
    taps = jnp.concatenate([xp[:, k:k + T, :] for k in range(3)], axis=-1)   # (B, T, 3F)
    taps = jnp.transpose(taps, (1, 0, 2))                                    # (T, B, 3F)
    taps = jnp.pad(taps, ((0, 1), (0, SUB - B), (0, KC - 3 * F)))            # (T+1, SUB, KC)
    return taps.reshape((T + 1) * SUB, KC).astype(jnp.bfloat16)


@functools.partial(jax.jit, static_argnames=("H", "num_layers", "out_dim"))
def cnn_lstm_forward(x, weight_slab, vpack, *, H, num_layers, out_dim):
    assert num_layers == 2, "fused kernel is specialized to the module's 2-layer LSTM"
    B, T, F = x.shape
    SUB = max(8, _round_up(B, 8))
    layout = slab_layout(F, H)
    xi = _build_im2col(x, SUB, layout["kc"])
    kernel = make_cnn_lstm_kernel(T, F, H, SUB, layout)
    vmem = pl.BlockSpec(memory_space=pltpu.MemorySpace.VMEM)
    out = pl.pallas_call(
        kernel,
        out_shape=jax.ShapeDtypeStruct((SUB, LANE), jnp.float32),   # lane-dense output
        in_specs=[vmem, vmem, vmem],
        out_specs=vmem,
    )(xi, weight_slab, vpack)
    return out[:B, :out_dim]


def init_params(key, F, H, num_layers, out_dim):
    """Deterministic synthetic parameters in PyTorch layout (shapes match __init__)."""
    Hh = H // 2
    keys = jax.random.split(key, 32)
    p = {}
    p["conv_w_pt"] = 0.1 * jax.random.normal(keys[0], (CONV_OUT, F, 3), jnp.float32)
    p["conv_b_pt"] = 0.1 * jax.random.normal(keys[1], (CONV_OUT,), jnp.float32)
    ki = 2
    for l in range(num_layers):
        in_dim = CONV_OUT if l == 0 else H
        p[f"w_ih{l}_pt"] = 0.1 * jax.random.normal(keys[ki], (4 * H, in_dim), jnp.float32); ki += 1
        p[f"w_hh{l}_pt"] = 0.1 * jax.random.normal(keys[ki], (4 * H, H), jnp.float32); ki += 1
        p[f"b_ih{l}_pt"] = 0.1 * jax.random.normal(keys[ki], (4 * H,), jnp.float32); ki += 1
        p[f"b_hh{l}_pt"] = 0.1 * jax.random.normal(keys[ki], (4 * H,), jnp.float32); ki += 1
    p["fc1_w_pt"] = 0.1 * jax.random.normal(keys[ki], (Hh, H), jnp.float32); ki += 1
    p["fc1_b_pt"] = 0.1 * jax.random.normal(keys[ki], (Hh,), jnp.float32); ki += 1
    p["fc2_w_pt"] = 0.1 * jax.random.normal(keys[ki], (out_dim, Hh), jnp.float32); ki += 1
    p["fc2_b_pt"] = 0.1 * jax.random.normal(keys[ki], (out_dim,), jnp.float32); ki += 1
    # BatchNorm1d(H//2) eval-mode parameters / running stats (made non-trivial so the BN
    # path is actually exercised by the reference check).
    p["bn_g"] = 1.0 + 0.1 * jax.random.normal(keys[ki], (Hh,), jnp.float32); ki += 1
    p["bn_b"] = 0.1 * jax.random.normal(keys[ki], (Hh,), jnp.float32); ki += 1
    p["bn_m"] = 0.1 * jax.random.normal(keys[ki], (Hh,), jnp.float32); ki += 1
    p["bn_v"] = 1.0 + 0.1 * jnp.abs(jax.random.normal(keys[ki], (Hh,), jnp.float32)); ki += 1
    return p


def pack_params(p, F, H, num_layers, out_dim):
    """Pre-transpose / gate-interleave / pad PyTorch-layout params into the kernel layout:
    one bf16 weight slab + one (8, 2G) f32 vector pack."""
    assert num_layers == 2, "packing is specialized to the module's 2-layer LSTM"
    G = 4 * H
    assert G == LANE, "packing assumes 4*hidden_size == 128 (hidden_size == 32)"
    G2 = 2 * G
    layout = slab_layout(F, H)
    rows = layout["rows"]

    def interleave(a, b):
        # a, b: (rows, 4H). Result (rows, 8H), columns [a_i b_i a_f b_f a_g b_g a_o b_o].
        r = a.shape[0]
        return jnp.stack([a.reshape(r, 4, H), b.reshape(r, 4, H)], axis=2).reshape(r, G2)

    def place(sec, n_rows):
        return jnp.pad(sec, ((0, n_rows - sec.shape[0]), (0, G2 - sec.shape[1])))

    # Conv taps (64, F, 3) -> (3, F, 64) -> (3F, 64); row index = tap*F + feature.
    wc = jnp.transpose(p["conv_w_pt"], (2, 1, 0)).reshape(3 * F, CONV_OUT)
    # Layer-0 input projection; layer-1 gate columns are zero.
    wih0 = interleave(p["w_ih0_pt"].T, jnp.zeros((CONV_OUT, G), jnp.float32))
    # Fused recurrent weight: rows 0:H act on h0 (whh0 for layer 0, wih1 for layer 1),
    # rows H:2H act on h1 (whh1 for layer 1 only).
    wrec = jnp.concatenate(
        [interleave(p["w_hh0_pt"].T, p["w_ih1_pt"].T),
         interleave(jnp.zeros((H, G), jnp.float32), p["w_hh1_pt"].T)], axis=0)
    fc1 = p["fc1_w_pt"].T                        # (H, H//2)
    fc2 = p["fc2_w_pt"].T                        # (H//2, out_dim)

    slab = jnp.concatenate(
        [place(wc, rows["wc"]), place(wih0, rows["wih0"]), place(wrec, rows["wrec"]),
         place(fc1, rows["fc1"]), place(fc2, rows["fc2"])], axis=0).astype(jnp.bfloat16)
    assert slab.shape == (layout["total"], G2)

    def vrow(v, fill=0.0):
        v = v.reshape(-1)
        return jnp.pad(v, (0, G2 - v.shape[0]), constant_values=fill)

    bias_all = interleave((p["b_ih0_pt"] + p["b_hh0_pt"])[None, :],
                          (p["b_ih1_pt"] + p["b_hh1_pt"])[None, :])[0]
    vpack = jnp.stack(
        [vrow(p["conv_b_pt"]), bias_all, vrow(p["fc1_b_pt"]),
         vrow(p["bn_g"]), vrow(p["bn_b"]), vrow(p["bn_m"]),
         vrow(p["bn_v"], fill=1.0), vrow(p["fc2_b_pt"])], axis=0).astype(jnp.float32)

    return {"slab": slab, "vpack": vpack}


def reference_forward(x, p, H, num_layers):
    """Pure-JAX f32 reference of CNN_LSTM_Model.forward (eval mode)."""
    B, T, F = x.shape
    xp = jnp.pad(x, ((0, 0), (1, 1), (0, 0)))
    taps = jnp.stack([xp[:, k:k + T, :] for k in range(3)], axis=2)          # (B, T, 3, F)
    seq = jax.nn.relu(jnp.einsum("btkf,ofk->bto", taps, p["conv_w_pt"]) + p["conv_b_pt"])
    for l in range(num_layers):
        w_ih, w_hh = p[f"w_ih{l}_pt"], p[f"w_hh{l}_pt"]
        b = p[f"b_ih{l}_pt"] + p[f"b_hh{l}_pt"]
        h = jnp.zeros((B, H), jnp.float32)
        c = jnp.zeros((B, H), jnp.float32)
        outs = []
        for t in range(T):
            g = seq[:, t] @ w_ih.T + h @ w_hh.T + b
            i = jax.nn.sigmoid(g[:, 0:H])
            f = jax.nn.sigmoid(g[:, H:2 * H])
            gg = jnp.tanh(g[:, 2 * H:3 * H])
            o = jax.nn.sigmoid(g[:, 3 * H:4 * H])
            c = f * c + i * gg
            h = o * jnp.tanh(c)
            outs.append(h)
        seq = jnp.stack(outs, axis=1)
    last = seq[:, -1]
    z = last @ p["fc1_w_pt"].T + p["fc1_b_pt"]
    z = (z - p["bn_m"]) / jnp.sqrt(p["bn_v"] + 1e-5) * p["bn_g"] + p["bn_b"]
    z = jax.nn.relu(z)
    return z @ p["fc2_w_pt"].T + p["fc2_b_pt"]


if __name__ == "__main__":
    # input_features_per_step=8, sequence_length=8, hidden_size=32, num_layers=2, output_size=3
    B, T, F, H, L, OUT = 2, 8, 8, 32, 2, 3

    root = jax.random.PRNGKey(0)
    kx, kp = jax.random.split(root)
    x = jax.random.normal(kx, (B, T, F), jnp.float32)               # (batch, seq, features)
    params_pt = init_params(kp, F, H, L, OUT)
    packed = pack_params(params_pt, F, H, L, OUT)

    out = cnn_lstm_forward(x, packed["slab"], packed["vpack"], H=H, num_layers=L, out_dim=OUT)
    jax.block_until_ready(out)
    assert out.shape == (B, OUT)

    # bf16 weights bound the deviation from the f32 reference (review correctness note).
    ref = reference_forward(x, params_pt, H, L)
    err = float(jnp.max(jnp.abs(out - ref)))
    assert err < 5e-2, f"kernel deviates from f32 reference: max |err| = {err}"
    print("KERNEL_OK")
</pallas_src>

<mosaic_0001>
module attributes {stable_mosaic.version = 11 : i64} {
  func.func @kernel(%arg0: memref<72x32xbf16, #tpu.memory_space<vmem>>, %arg1: memref<320x256xbf16, #tpu.memory_space<vmem>>, %arg2: memref<8x256xf32, #tpu.memory_space<vmem>>, %arg3: memref<8x128xf32, #tpu.memory_space<vmem>>) attributes {dimension_semantics = [], scalar_prefetch = 0 : i64, scratch_operands = 0 : i64, tpu.core_type = #tpu.core_type<tc>} {
    %c0 = arith.constant 0 : index
    %c0_0 = arith.constant 0 : index
    %0 = vector.load %arg2[%c0, %c0_0] : memref<8x256xf32, #tpu.memory_space<vmem>>, vector<8x256xf32>
    %1 = vector.extract_strided_slice %0 {offsets = [0, 0], sizes = [1, 64], strides = [1, 1]} : vector<8x256xf32> to vector<1x64xf32>
    %2 = vector.shape_cast %1 : vector<1x64xf32> to vector<64xf32>
    %3 = vector.extract_strided_slice %0 {offsets = [1, 0], sizes = [1, 256], strides = [1, 1]} : vector<8x256xf32> to vector<1x256xf32>
    %4 = vector.shape_cast %3 : vector<1x256xf32> to vector<256xf32>
    %5 = vector.extract_strided_slice %0 {offsets = [2, 0], sizes = [1, 128], strides = [1, 1]} : vector<8x256xf32> to vector<1x128xf32>
    %6 = vector.shape_cast %5 : vector<1x128xf32> to vector<128xf32>
    %7 = vector.extract_strided_slice %0 {offsets = [3, 0], sizes = [1, 128], strides = [1, 1]} : vector<8x256xf32> to vector<1x128xf32>
    %8 = vector.shape_cast %7 : vector<1x128xf32> to vector<128xf32>
    %9 = vector.extract_strided_slice %0 {offsets = [4, 0], sizes = [1, 128], strides = [1, 1]} : vector<8x256xf32> to vector<1x128xf32>
    %10 = vector.shape_cast %9 : vector<1x128xf32> to vector<128xf32>
    %11 = vector.extract_strided_slice %0 {offsets = [5, 0], sizes = [1, 128], strides = [1, 1]} : vector<8x256xf32> to vector<1x128xf32>
    %12 = vector.shape_cast %11 : vector<1x128xf32> to vector<128xf32>
    %13 = vector.extract_strided_slice %0 {offsets = [6, 0], sizes = [1, 128], strides = [1, 1]} : vector<8x256xf32> to vector<1x128xf32>
    %14 = vector.shape_cast %13 : vector<1x128xf32> to vector<128xf32>
    %15 = vector.extract_strided_slice %0 {offsets = [7, 0], sizes = [1, 128], strides = [1, 1]} : vector<8x256xf32> to vector<1x128xf32>
    %16 = vector.shape_cast %15 : vector<1x128xf32> to vector<128xf32>
    %c0_1 = arith.constant 0 : index
    %c0_2 = arith.constant 0 : index
    %17 = vector.load %arg1[%c0_1, %c0_2] : memref<320x256xbf16, #tpu.memory_space<vmem>>, vector<32x64xbf16>
    %c32 = arith.constant 32 : index
    %c0_3 = arith.constant 0 : index
    %18 = vector.load %arg1[%c32, %c0_3] : memref<320x256xbf16, #tpu.memory_space<vmem>>, vector<64x256xbf16>
    %c96 = arith.constant 96 : index
    %c0_4 = arith.constant 0 : index
    %19 = vector.load %arg1[%c96, %c0_4] : memref<320x256xbf16, #tpu.memory_space<vmem>>, vector<64x256xbf16>
    %c160 = arith.constant 160 : index
    %c0_5 = arith.constant 0 : index
    %20 = vector.load %arg1[%c160, %c0_5] : memref<320x256xbf16, #tpu.memory_space<vmem>>, vector<32x128xbf16>
    %c192 = arith.constant 192 : index
    %c0_6 = arith.constant 0 : index
    %21 = vector.load %arg1[%c192, %c0_6] : memref<320x256xbf16, #tpu.memory_space<vmem>>, vector<128x128xbf16>
    %c0_7 = arith.constant 0 : index
    %c0_8 = arith.constant 0 : index
    %22 = vector.load %arg0[%c0_7, %c0_8] : memref<72x32xbf16, #tpu.memory_space<vmem>>, vector<72x32xbf16>
    %cst = arith.constant dense<0.000000e+00> : vector<72x64xf32>
    %23 = tpu.matmul %22, %17, %cst {dimension_numbers = #tpu.dot_dimension_numbers<[1], [0], [0], [1], [0, 0, 1, 1], [], []>} : vector<72x32xbf16>, vector<32x64xbf16>, vector<72x64xf32> -> vector<72x64xf32>
    %24 = vector.shape_cast %2 : vector<64xf32> to vector<1x64xf32>
    %25 = vector.broadcast %24 : vector<1x64xf32> to vector<72x64xf32>
    %26 = arith.addf %23, %25 : vector<72x64xf32>
    %cst_9 = arith.constant 0.000000e+00 : f32
    %27 = vector.broadcast %cst_9 : f32 to vector<72x64xf32>
    %28 = arith.maximumf %26, %27 : vector<72x64xf32>
    %29 = arith.truncf %28 : vector<72x64xf32> to vector<72x64xbf16>
    %cst_10 = arith.constant dense<0.000000e+00> : vector<72x256xf32>
    %30 = tpu.matmul %29, %18, %cst_10 {dimension_numbers = #tpu.dot_dimension_numbers<[1], [0], [0], [1], [0, 0, 1, 1], [], []>} : vector<72x64xbf16>, vector<64x256xbf16>, vector<72x256xf32> -> vector<72x256xf32>
    %31 = vector.shape_cast %4 : vector<256xf32> to vector<1x256xf32>
    %32 = vector.broadcast %31 : vector<1x256xf32> to vector<72x256xf32>
    %33 = arith.addf %30, %32 : vector<72x256xf32>
    %34 = tpu.iota {dimensions = array<i32: 1>} : vector<1x64xi32>
    %c32_i32 = arith.constant 32 : i32
    %35 = vector.broadcast %c32_i32 : i32 to vector<1x64xi32>
    %36 = arith.cmpi slt, %34, %35 : vector<1x64xi32>
    %37 = arith.extui %36 : vector<1x64xi1> to vector<1x64xi32>
    %38 = arith.sitofp %37 : vector<1x64xi32> to vector<1x64xf32>
    %cst_11 = arith.constant 0.000000e+00 : f32
    %39 = vector.broadcast %cst_11 : f32 to vector<8x64xf32>
    %40 = vector.extract_strided_slice %33 {offsets = [0, 0], sizes = [8, 256], strides = [1, 1]} : vector<72x256xf32> to vector<8x256xf32>
    %41 = arith.negf %40 : vector<8x256xf32>
    %42 = math.exp %41 : vector<8x256xf32>
    %cst_12 = arith.constant 1.000000e+00 : f32
    %43 = vector.broadcast %cst_12 : f32 to vector<8x256xf32>
    %44 = arith.addf %43, %42 : vector<8x256xf32>
    %45 = arith.divf %43, %44 : vector<8x256xf32>
    %46 = vector.extract_strided_slice %45 {offsets = [0, 0], sizes = [8, 64], strides = [1, 1]} : vector<8x256xf32> to vector<8x64xf32>
    %47 = vector.extract_strided_slice %45 {offsets = [0, 64], sizes = [8, 64], strides = [1, 1]} : vector<8x256xf32> to vector<8x64xf32>
    %48 = vector.extract_strided_slice %45 {offsets = [0, 192], sizes = [8, 64], strides = [1, 1]} : vector<8x256xf32> to vector<8x64xf32>
    %49 = vector.extract_strided_slice %40 {offsets = [0, 128], sizes = [8, 64], strides = [1, 1]} : vector<8x256xf32> to vector<8x64xf32>
    %50 = math.tanh %49 : vector<8x64xf32>
    %51 = arith.mulf %47, %39 : vector<8x64xf32>
    %52 = arith.mulf %46, %50 : vector<8x64xf32>
    %53 = arith.addf %51, %52 : vector<8x64xf32>
    %54 = math.tanh %53 : vector<8x64xf32>
    %55 = arith.mulf %48, %54 : vector<8x64xf32>
    %56 = vector.broadcast %38 : vector<1x64xf32> to vector<8x64xf32>
    %57 = arith.mulf %55, %56 : vector<8x64xf32>
    %58 = vector.broadcast %38 : vector<1x64xf32> to vector<8x64xf32>
    %59 = arith.mulf %53, %58 : vector<8x64xf32>
    %60 = vector.extract_strided_slice %33 {offsets = [8, 0], sizes = [8, 256], strides = [1, 1]} : vector<72x256xf32> to vector<8x256xf32>
    %61 = arith.truncf %57 : vector<8x64xf32> to vector<8x64xbf16>
    %cst_13 = arith.constant dense<0.000000e+00> : vector<8x256xf32>
    %62 = tpu.matmul %61, %19, %cst_13 {dimension_numbers = #tpu.dot_dimension_numbers<[1], [0], [0], [1], [0, 0, 1, 1], [], []>} : vector<8x64xbf16>, vector<64x256xbf16>, vector<8x256xf32> -> vector<8x256xf32>
    %63 = arith.addf %60, %62 : vector<8x256xf32>
    %64 = arith.negf %63 : vector<8x256xf32>
    %65 = math.exp %64 : vector<8x256xf32>
    %cst_14 = arith.constant 1.000000e+00 : f32
    %66 = vector.broadcast %cst_14 : f32 to vector<8x256xf32>
    %67 = arith.addf %66, %65 : vector<8x256xf32>
    %68 = arith.divf %66, %67 : vector<8x256xf32>
    %69 = vector.extract_strided_slice %68 {offsets = [0, 0], sizes = [8, 64], strides = [1, 1]} : vector<8x256xf32> to vector<8x64xf32>
    %70 = vector.extract_strided_slice %68 {offsets = [0, 64], sizes = [8, 64], strides = [1, 1]} : vector<8x256xf32> to vector<8x64xf32>
    %71 = vector.extract_strided_slice %68 {offsets = [0, 192], sizes = [8, 64], strides = [1, 1]} : vector<8x256xf32> to vector<8x64xf32>
    %72 = vector.extract_strided_slice %63 {offsets = [0, 128], sizes = [8, 64], strides = [1, 1]} : vector<8x256xf32> to vector<8x64xf32>
    %73 = math.tanh %72 : vector<8x64xf32>
    %74 = arith.mulf %70, %59 : vector<8x64xf32>
    %75 = arith.mulf %69, %73 : vector<8x64xf32>
    %76 = arith.addf %74, %75 : vector<8x64xf32>
    %77 = math.tanh %76 : vector<8x64xf32>
    %78 = arith.mulf %71, %77 : vector<8x64xf32>
    %79 = vector.extract_strided_slice %33 {offsets = [16, 0], sizes = [8, 256], strides = [1, 1]} : vector<72x256xf32> to vector<8x256xf32>
    %80 = arith.truncf %78 : vector<8x64xf32> to vector<8x64xbf16>
    %cst_15 = arith.constant dense<0.000000e+00> : vector<8x256xf32>
    %81 = tpu.matmul %80, %19, %cst_15 {dimension_numbers = #tpu.dot_dimension_numbers<[1], [0], [0], [1], [0, 0, 1, 1], [], []>} : vector<8x64xbf16>, vector<64x256xbf16>, vector<8x256xf32> -> vector<8x256xf32>
    %82 = arith.addf %79, %81 : vector<8x256xf32>
    %83 = arith.negf %82 : vector<8x256xf32>
    %84 = math.exp %83 : vector<8x256xf32>
    %cst_16 = arith.constant 1.000000e+00 : f32
    %85 = vector.broadcast %cst_16 : f32 to vector<8x256xf32>
    %86 = arith.addf %85, %84 : vector<8x256xf32>
    %87 = arith.divf %85, %86 : vector<8x256xf32>
    %88 = vector.extract_strided_slice %87 {offsets = [0, 0], sizes = [8, 64], strides = [1, 1]} : vector<8x256xf32> to vector<8x64xf32>
    %89 = vector.extract_strided_slice %87 {offsets = [0, 64], sizes = [8, 64], strides = [1, 1]} : vector<8x256xf32> to vector<8x64xf32>
    %90 = vector.extract_strided_slice %87 {offsets = [0, 192], sizes = [8, 64], strides = [1, 1]} : vector<8x256xf32> to vector<8x64xf32>
    %91 = vector.extract_strided_slice %82 {offsets = [0, 128], sizes = [8, 64], strides = [1, 1]} : vector<8x256xf32> to vector<8x64xf32>
    %92 = math.tanh %91 : vector<8x64xf32>
    %93 = arith.mulf %89, %76 : vector<8x64xf32>
    %94 = arith.mulf %88, %92 : vector<8x64xf32>
    %95 = arith.addf %93, %94 : vector<8x64xf32>
    %96 = math.tanh %95 : vector<8x64xf32>
    %97 = arith.mulf %90, %96 : vector<8x64xf32>
    %98 = vector.extract_strided_slice %33 {offsets = [24, 0], sizes = [8, 256], strides = [1, 1]} : vector<72x256xf32> to vector<8x256xf32>
    %99 = arith.truncf %97 : vector<8x64xf32> to vector<8x64xbf16>
    %cst_17 = arith.constant dense<0.000000e+00> : vector<8x256xf32>
    %100 = tpu.matmul %99, %19, %cst_17 {dimension_numbers = #tpu.dot_dimension_numbers<[1], [0], [0], [1], [0, 0, 1, 1], [], []>} : vector<8x64xbf16>, vector<64x256xbf16>, vector<8x256xf32> -> vector<8x256xf32>
    %101 = arith.addf %98, %100 : vector<8x256xf32>
    %102 = arith.negf %101 : vector<8x256xf32>
    %103 = math.exp %102 : vector<8x256xf32>
    %cst_18 = arith.constant 1.000000e+00 : f32
    %104 = vector.broadcast %cst_18 : f32 to vector<8x256xf32>
    %105 = arith.addf %104, %103 : vector<8x256xf32>
    %106 = arith.divf %104, %105 : vector<8x256xf32>
    %107 = vector.extract_strided_slice %106 {offsets = [0, 0], sizes = [8, 64], strides = [1, 1]} : vector<8x256xf32> to vector<8x64xf32>
    %108 = vector.extract_strided_slice %106 {offsets = [0, 64], sizes = [8, 64], strides = [1, 1]} : vector<8x256xf32> to vector<8x64xf32>
    %109 = vector.extract_strided_slice %106 {offsets = [0, 192], sizes = [8, 64], strides = [1, 1]} : vector<8x256xf32> to vector<8x64xf32>
    %110 = vector.extract_strided_slice %101 {offsets = [0, 128], sizes = [8, 64], strides = [1, 1]} : vector<8x256xf32> to vector<8x64xf32>
    %111 = math.tanh %110 : vector<8x64xf32>
    %112 = arith.mulf %108, %95 : vector<8x64xf32>
    %113 = arith.mulf %107, %111 : vector<8x64xf32>
    %114 = arith.addf %112, %113 : vector<8x64xf32>
    %115 = math.tanh %114 : vector<8x64xf32>
    %116 = arith.mulf %109, %115 : vector<8x64xf32>
    %117 = vector.extract_strided_slice %33 {offsets = [32, 0], sizes = [8, 256], strides = [1, 1]} : vector<72x256xf32> to vector<8x256xf32>
    %118 = arith.truncf %116 : vector<8x64xf32> to vector<8x64xbf16>
    %cst_19 = arith.constant dense<0.000000e+00> : vector<8x256xf32>
    %119 = tpu.matmul %118, %19, %cst_19 {dimension_numbers = #tpu.dot_dimension_numbers<[1], [0], [0], [1], [0, 0, 1, 1], [], []>} : vector<8x64xbf16>, vector<64x256xbf16>, vector<8x256xf32> -> vector<8x256xf32>
    %120 = arith.addf %117, %119 : vector<8x256xf32>
    %121 = arith.negf %120 : vector<8x256xf32>
    %122 = math.exp %121 : vector<8x256xf32>
    %cst_20 = arith.constant 1.000000e+00 : f32
    %123 = vector.broadcast %cst_20 : f32 to vector<8x256xf32>
    %124 = arith.addf %123, %122 : vector<8x256xf32>
    %125 = arith.divf %123, %124 : vector<8x256xf32>
    %126 = vector.extract_strided_slice %125 {offsets = [0, 0], sizes = [8, 64], strides = [1, 1]} : vector<8x256xf32> to vector<8x64xf32>
    %127 = vector.extract_strided_slice %125 {offsets = [0, 64], sizes = [8, 64], strides = [1, 1]} : vector<8x256xf32> to vector<8x64xf32>
    %128 = vector.extract_strided_slice %125 {offsets = [0, 192], sizes = [8, 64], strides = [1, 1]} : vector<8x256xf32> to vector<8x64xf32>
    %129 = vector.extract_strided_slice %120 {offsets = [0, 128], sizes = [8, 64], strides = [1, 1]} : vector<8x256xf32> to vector<8x64xf32>
    %130 = math.tanh %129 : vector<8x64xf32>
    %131 = arith.mulf %127, %114 : vector<8x64xf32>
    %132 = arith.mulf %126, %130 : vector<8x64xf32>
    %133 = arith.addf %131, %132 : vector<8x64xf32>
    %134 = math.tanh %133 : vector<8x64xf32>
    %135 = arith.mulf %128, %134 : vector<8x64xf32>
    %136 = vector.extract_strided_slice %33 {offsets = [40, 0], sizes = [8, 256], strides = [1, 1]} : vector<72x256xf32> to vector<8x256xf32>
    %137 = arith.truncf %135 : vector<8x64xf32> to vector<8x64xbf16>
    %cst_21 = arith.constant dense<0.000000e+00> : vector<8x256xf32>
    %138 = tpu.matmul %137, %19, %cst_21 {dimension_numbers = #tpu.dot_dimension_numbers<[1], [0], [0], [1], [0, 0, 1, 1], [], []>} : vector<8x64xbf16>, vector<64x256xbf16>, vector<8x256xf32> -> vector<8x256xf32>
    %139 = arith.addf %136, %138 : vector<8x256xf32>
    %140 = arith.negf %139 : vector<8x256xf32>
    %141 = math.exp %140 : vector<8x256xf32>
    %cst_22 = arith.constant 1.000000e+00 : f32
    %142 = vector.broadcast %cst_22 : f32 to vector<8x256xf32>
    %143 = arith.addf %142, %141 : vector<8x256xf32>
    %144 = arith.divf %142, %143 : vector<8x256xf32>
    %145 = vector.extract_strided_slice %144 {offsets = [0, 0], sizes = [8, 64], strides = [1, 1]} : vector<8x256xf32> to vector<8x64xf32>
    %146 = vector.extract_strided_slice %144 {offsets = [0, 64], sizes = [8, 64], strides = [1, 1]} : vector<8x256xf32> to vector<8x64xf32>
    %147 = vector.extract_strided_slice %144 {offsets = [0, 192], sizes = [8, 64], strides = [1, 1]} : vector<8x256xf32> to vector<8x64xf32>
    %148 = vector.extract_strided_slice %139 {offsets = [0, 128], sizes = [8, 64], strides = [1, 1]} : vector<8x256xf32> to vector<8x64xf32>
    %149 = math.tanh %148 : vector<8x64xf32>
    %150 = arith.mulf %146, %133 : vector<8x64xf32>
    %151 = arith.mulf %145, %149 : vector<8x64xf32>
    %152 = arith.addf %150, %151 : vector<8x64xf32>
    %153 = math.tanh %152 : vector<8x64xf32>
    %154 = arith.mulf %147, %153 : vector<8x64xf32>
    %155 = vector.extract_strided_slice %33 {offsets = [48, 0], sizes = [8, 256], strides = [1, 1]} : vector<72x256xf32> to vector<8x256xf32>
    %156 = arith.truncf %154 : vector<8x64xf32> to vector<8x64xbf16>
    %cst_23 = arith.constant dense<0.000000e+00> : vector<8x256xf32>
    %157 = tpu.matmul %156, %19, %cst_23 {dimension_numbers = #tpu.dot_dimension_numbers<[1], [0], [0], [1], [0, 0, 1, 1], [], []>} : vector<8x64xbf16>, vector<64x256xbf16>, vector<8x256xf32> -> vector<8x256xf32>
    %158 = arith.addf %155, %157 : vector<8x256xf32>
    %159 = arith.negf %158 : vector<8x256xf32>
    %160 = math.exp %159 : vector<8x256xf32>
    %cst_24 = arith.constant 1.000000e+00 : f32
    %161 = vector.broadcast %cst_24 : f32 to vector<8x256xf32>
    %162 = arith.addf %161, %160 : vector<8x256xf32>
    %163 = arith.divf %161, %162 : vector<8x256xf32>
    %164 = vector.extract_strided_slice %163 {offsets = [0, 0], sizes = [8, 64], strides = [1, 1]} : vector<8x256xf32> to vector<8x64xf32>
    %165 = vector.extract_strided_slice %163 {offsets = [0, 64], sizes = [8, 64], strides = [1, 1]} : vector<8x256xf32> to vector<8x64xf32>
    %166 = vector.extract_strided_slice %163 {offsets = [0, 192], sizes = [8, 64], strides = [1, 1]} : vector<8x256xf32> to vector<8x64xf32>
    %167 = vector.extract_strided_slice %158 {offsets = [0, 128], sizes = [8, 64], strides = [1, 1]} : vector<8x256xf32> to vector<8x64xf32>
    %168 = math.tanh %167 : vector<8x64xf32>
    %169 = arith.mulf %165, %152 : vector<8x64xf32>
    %170 = arith.mulf %164, %168 : vector<8x64xf32>
    %171 = arith.addf %169, %170 : vector<8x64xf32>
    %172 = math.tanh %171 : vector<8x64xf32>
    %173 = arith.mulf %166, %172 : vector<8x64xf32>
    %174 = vector.extract_strided_slice %33 {offsets = [56, 0], sizes = [8, 256], strides = [1, 1]} : vector<72x256xf32> to vector<8x256xf32>
    %175 = arith.truncf %173 : vector<8x64xf32> to vector<8x64xbf16>
    %cst_25 = arith.constant dense<0.000000e+00> : vector<8x256xf32>
    %176 = tpu.matmul %175, %19, %cst_25 {dimension_numbers = #tpu.dot_dimension_numbers<[1], [0], [0], [1], [0, 0, 1, 1], [], []>} : vector<8x64xbf16>, vector<64x256xbf16>, vector<8x256xf32> -> vector<8x256xf32>
    %177 = arith.addf %174, %176 : vector<8x256xf32>
    %178 = arith.negf %177 : vector<8x256xf32>
    %179 = math.exp %178 : vector<8x256xf32>
    %cst_26 = arith.constant 1.000000e+00 : f32
    %180 = vector.broadcast %cst_26 : f32 to vector<8x256xf32>
    %181 = arith.addf %180, %179 : vector<8x256xf32>
    %182 = arith.divf %180, %181 : vector<8x256xf32>
    %183 = vector.extract_strided_slice %182 {offsets = [0, 0], sizes = [8, 64], strides = [1, 1]} : vector<8x256xf32> to vector<8x64xf32>
    %184 = vector.extract_strided_slice %182 {offsets = [0, 64], sizes = [8, 64], strides = [1, 1]} : vector<8x256xf32> to vector<8x64xf32>
    %185 = vector.extract_strided_slice %182 {offsets = [0, 192], sizes = [8, 64], strides = [1, 1]} : vector<8x256xf32> to vector<8x64xf32>
    %186 = vector.extract_strided_slice %177 {offsets = [0, 128], sizes = [8, 64], strides = [1, 1]} : vector<8x256xf32> to vector<8x64xf32>
    %187 = math.tanh %186 : vector<8x64xf32>
    %188 = arith.mulf %184, %171 : vector<8x64xf32>
    %189 = arith.mulf %183, %187 : vector<8x64xf32>
    %190 = arith.addf %188, %189 : vector<8x64xf32>
    %191 = math.tanh %190 : vector<8x64xf32>
    %192 = arith.mulf %185, %191 : vector<8x64xf32>
    %193 = vector.extract_strided_slice %33 {offsets = [64, 0], sizes = [8, 256], strides = [1, 1]} : vector<72x256xf32> to vector<8x256xf32>
    %194 = arith.truncf %192 : vector<8x64xf32> to vector<8x64xbf16>
    %cst_27 = arith.constant dense<0.000000e+00> : vector<8x256xf32>
    %195 = tpu.matmul %194, %19, %cst_27 {dimension_numbers = #tpu.dot_dimension_numbers<[1], [0], [0], [1], [0, 0, 1, 1], [], []>} : vector<8x64xbf16>, vector<64x256xbf16>, vector<8x256xf32> -> vector<8x256xf32>
    %196 = arith.addf %193, %195 : vector<8x256xf32>
    %197 = arith.negf %196 : vector<8x256xf32>
    %198 = math.exp %197 : vector<8x256xf32>
    %cst_28 = arith.constant 1.000000e+00 : f32
    %199 = vector.broadcast %cst_28 : f32 to vector<8x256xf32>
    %200 = arith.addf %199, %198 : vector<8x256xf32>
    %201 = arith.divf %199, %200 : vector<8x256xf32>
    %202 = vector.extract_strided_slice %201 {offsets = [0, 0], sizes = [8, 64], strides = [1, 1]} : vector<8x256xf32> to vector<8x64xf32>
    %203 = vector.extract_strided_slice %201 {offsets = [0, 64], sizes = [8, 64], strides = [1, 1]} : vector<8x256xf32> to vector<8x64xf32>
    %204 = vector.extract_strided_slice %201 {offsets = [0, 192], sizes = [8, 64], strides = [1, 1]} : vector<8x256xf32> to vector<8x64xf32>
    %205 = vector.extract_strided_slice %196 {offsets = [0, 128], sizes = [8, 64], strides = [1, 1]} : vector<8x256xf32> to vector<8x64xf32>
    %206 = math.tanh %205 : vector<8x64xf32>
    %207 = arith.mulf %203, %190 : vector<8x64xf32>
    %208 = arith.mulf %202, %206 : vector<8x64xf32>
    %209 = arith.addf %207, %208 : vector<8x64xf32>
    %210 = math.tanh %209 : vector<8x64xf32>
    %211 = arith.mulf %204, %210 : vector<8x64xf32>
    %212 = vector.extract_strided_slice %211 {offsets = [0, 32], sizes = [8, 32], strides = [1, 1]} : vector<8x64xf32> to vector<8x32xf32>
    %213 = arith.truncf %212 : vector<8x32xf32> to vector<8x32xbf16>
    %cst_29 = arith.constant dense<0.000000e+00> : vector<8x128xf32>
    %214 = tpu.matmul %213, %20, %cst_29 {dimension_numbers = #tpu.dot_dimension_numbers<[1], [0], [0], [1], [0, 0, 1, 1], [], []>} : vector<8x32xbf16>, vector<32x128xbf16>, vector<8x128xf32> -> vector<8x128xf32>
    %215 = vector.shape_cast %6 : vector<128xf32> to vector<1x128xf32>
    %216 = vector.broadcast %215 : vector<1x128xf32> to vector<8x128xf32>
    %217 = arith.addf %214, %216 : vector<8x128xf32>
    %218 = vector.shape_cast %12 : vector<128xf32> to vector<1x128xf32>
    %219 = vector.broadcast %218 : vector<1x128xf32> to vector<8x128xf32>
    %220 = arith.subf %217, %219 : vector<8x128xf32>
    %cst_30 = arith.constant 9.99999974E-6 : f32
    %221 = vector.broadcast %cst_30 : f32 to vector<128xf32>
    %222 = arith.addf %14, %221 : vector<128xf32>
    %223 = math.rsqrt %222 : vector<128xf32>
    %224 = vector.shape_cast %223 : vector<128xf32> to vector<1x128xf32>
    %225 = vector.broadcast %224 : vector<1x128xf32> to vector<8x128xf32>
    %226 = arith.mulf %220, %225 : vector<8x128xf32>
    %227 = vector.shape_cast %8 : vector<128xf32> to vector<1x128xf32>
    %228 = vector.broadcast %227 : vector<1x128xf32> to vector<8x128xf32>
    %229 = arith.mulf %226, %228 : vector<8x128xf32>
    %230 = vector.shape_cast %10 : vector<128xf32> to vector<1x128xf32>
    %231 = vector.broadcast %230 : vector<1x128xf32> to vector<8x128xf32>
    %232 = arith.addf %229, %231 : vector<8x128xf32>
    %cst_31 = arith.constant 0.000000e+00 : f32
    %233 = vector.broadcast %cst_31 : f32 to vector<8x128xf32>
    %234 = arith.maximumf %232, %233 : vector<8x128xf32>
    %235 = arith.truncf %234 : vector<8x128xf32> to vector<8x128xbf16>
    %cst_32 = arith.constant dense<0.000000e+00> : vector<8x128xf32>
    %236 = tpu.matmul %235, %21, %cst_32 {dimension_numbers = #tpu.dot_dimension_numbers<[1], [0], [0], [1], [0, 0, 1, 1], [], []>} : vector<8x128xbf16>, vector<128x128xbf16>, vector<8x128xf32> -> vector<8x128xf32>
    %237 = vector.shape_cast %16 : vector<128xf32> to vector<1x128xf32>
    %238 = vector.broadcast %237 : vector<1x128xf32> to vector<8x128xf32>
    %239 = arith.addf %236, %238 : vector<8x128xf32>
    %c0_33 = arith.constant 0 : index
    %c0_34 = arith.constant 0 : index
    %240 = vector.load %arg3[%c0_33, %c0_34] : memref<8x128xf32, #tpu.memory_space<vmem>>, vector<8x128xf32>
    tpu.vector_store %arg3[%c0_33, %c0_34], %239 {strides = array<i32>} : memref<8x128xf32, #tpu.memory_space<vmem>>, vector<8x128xf32>,
    return
  }
}

</mosaic_0001>

<llo_original>
// kernel: cnn_lstm_forward.1
$region0: #{cnn_lstm_forward.1}
  #allocation0 [shape = 'u32[]', space=smem, size = 0x4, offset = 0x4, fixed_abs, tag = 'smem constant byte address 0x4 - core index']
  #allocation1 [shape = 'u32[72,128]{1,0:T(1,128)}', space=vmem, size = 0x9000, scoped, tag = 'internal scratch']
  %s0 = inlined_call_operand.vmem [shape: bf16[72,32], index: 0, kind: input, shape index: {}]
  %s1 = inlined_call_operand.hbm [shape: bf16[320,256], index: 1, kind: input, shape index: {}]
  %s2 = inlined_call_operand.vmem [shape: f32[8,256], index: 2, kind: input, shape index: {}]
  %s3 = inlined_call_operand.vmem [shape: f32[8,128], index: 3, kind: output, shape index: {}]
  %s4 = sld [smem:[#allocation0]]
  $region26: #{cnn_lstm_forward.1} parent=0
    _
  %s6 = ssub.s32 1, %s4
  %s7 = scalar_select 0, %s6, %s4
  $region1: #{cnn_lstm_forward.1} parent=0
    #allocation2 [shape = 'u8[163840]{0}', space=vmem, size = 0x28000, scoped, tag = 'input window, operand 1, single buffered']
    #allocation3 [shape = 's32[1]{0}', space=sflag, size = 0x4, scoped, tag = 'scoped memory for cnn_lstm_forward.1']
    %8 = vsyncpa [#allocation3], 0
    // Predicated region
    $region2: #{cnn_lstm_forward.1} parent=1 // pred_check
      _
    $region3: #{cnn_lstm_forward.1} parent=1 // pred_check_branch
      %10 = sbr.rel (0) target = $region5
    $region4: #{cnn_lstm_forward.1} parent=1 // pred_region
      _
    $region5: #{cnn_lstm_forward.1} parent=1 // pred_fallthru
      _
    // Predicated region
    $region6: #{cnn_lstm_forward.1} parent=1 // pred_check
      _
    $region7: #{cnn_lstm_forward.1} parent=1 // pred_check_branch
      %12 = sbr.rel (0) target = $region9
    $region8: #{cnn_lstm_forward.1} parent=1 // pred_region
      %14 = vsyncadd [#allocation3], 0
      %s15 = sshll.u32 %s1, 4
      %s16 = int_to_ptr.hbm [resolvable:$true] %s15
      %s17 = sshll.u32 [#allocation2], 4
      %s18 = int_to_ptr.vmem [resolvable:$true] %s17
      %23 = dma.hbm_to_vmem [thread:$0]  %s16, 5120, %s18, [#allocation3], 128, 128, 8
    $region9: #{cnn_lstm_forward.1} parent=1 // pred_fallthru
      _
    // Predicated region
    $region10: #{cnn_lstm_forward.1} parent=1 // pred_check
      _
    $region11: #{cnn_lstm_forward.1} parent=1 // pred_check_branch
      %25 = sbr.rel (0) target = $region13
    $region12: #{cnn_lstm_forward.1} parent=1 // pred_region
      _
    $region13: #{cnn_lstm_forward.1} parent=1 // pred_fallthru
      _
    // Predicated region
    $region14: #{cnn_lstm_forward.1} parent=1 // pred_check
      _
    $region15: #{cnn_lstm_forward.1} parent=1 // pred_check_branch
      %27 = sbr.rel (0) target = $region17
    $region16: #{cnn_lstm_forward.1} parent=1 // pred_region
      %29 = dma.done [#allocation3], 5120
    $region17: #{cnn_lstm_forward.1} parent=1 // pred_fallthru
      _
    %v31 = vld [vmem:[%s2] sm:$0xff]
    %v32 = vld [vmem:[%s2 + $0x8] sm:$0xff]
    %v33 = vld [vmem:[#allocation2] sm:$0xf]
    %v34 = vld [vmem:[#allocation2 + $0x8] sm:$0xf]
    %v35 = vld [vmem:[#allocation2 + $0x10] sm:$0xf]
    %v36 = vld [vmem:[#allocation2 + $0x18] sm:$0xf]
    %v37 = vld [vmem:[#allocation2 + $0x20] sm:$0xff]
    %v38 = vld [vmem:[#allocation2 + $0x28] sm:$0xff]
    %v39 = vld [vmem:[#allocation2 + $0x30] sm:$0xff]
    %v40 = vld [vmem:[#allocation2 + $0x38] sm:$0xff]
    %v41 = vld [vmem:[#allocation2 + $0x40] sm:$0xff]
    %v42 = vld [vmem:[#allocation2 + $0x48] sm:$0xff]
    %v43 = vld [vmem:[#allocation2 + $0x50] sm:$0xff]
    %v44 = vld [vmem:[#allocation2 + $0x58] sm:$0xff]
    %v45 = vld [vmem:[#allocation2 + $0x60] sm:$0xff]
    %v46 = vld [vmem:[#allocation2 + $0x68] sm:$0xff]
    %v47 = vld [vmem:[#allocation2 + $0x70] sm:$0xff]
    %v48 = vld [vmem:[#allocation2 + $0x78] sm:$0xff]
    %v49 = vld [vmem:[#allocation2 + $0x80] sm:$0xff]
    %v50 = vld [vmem:[#allocation2 + $0x88] sm:$0xff]
    %v51 = vld [vmem:[#allocation2 + $0x90] sm:$0xff]
    %v52 = vld [vmem:[#allocation2 + $0x98] sm:$0xff]
    %v53 = vld [vmem:[#allocation2 + $0xa0] sm:$0xf]
    %v54 = vld [vmem:[#allocation2 + $0xa8] sm:$0xf]
    %v55 = vld [vmem:[#allocation2 + $0xb0] sm:$0xf]
    %v56 = vld [vmem:[#allocation2 + $0xb8] sm:$0xf]
    %v57 = vld [vmem:[#allocation2 + $0xc0] sm:$0xf]
    %v58 = vld [vmem:[#allocation2 + $0xc8] sm:$0xf]
    %v59 = vld [vmem:[#allocation2 + $0xd0] sm:$0xf]
    %v60 = vld [vmem:[#allocation2 + $0xd8] sm:$0xf]
    %v61 = vld [vmem:[#allocation2 + $0xe0] sm:$0xf]
    %v62 = vld [vmem:[#allocation2 + $0xe8] sm:$0xf]
    %v63 = vld [vmem:[#allocation2 + $0xf0] sm:$0xf]
    %v64 = vld [vmem:[#allocation2 + $0xf8] sm:$0xf]
    %v65 = vld [vmem:[#allocation2 + $0x100] sm:$0xf]
    %v66 = vld [vmem:[#allocation2 + $0x108] sm:$0xf]
    %v67 = vld [vmem:[#allocation2 + $0x110] sm:$0xf]
    %v68 = vld [vmem:[#allocation2 + $0x118] sm:$0xf]
    %v69 = vld [vmem:[#allocation2 + $0x120] sm:$0xf]
    %v70 = vld [vmem:[#allocation2 + $0x128] sm:$0xf]
    %v71 = vld [vmem:[#allocation2 + $0x130] sm:$0xf]
    %v72 = vld [vmem:[#allocation2 + $0x138] sm:$0xf]
    %v73 = vld [vmem:[%s0] sm:$0xf]
    %v74 = vld [vmem:[%s0 + $0x4] sm:$0xf]
    %v75 = vld [vmem:[%s0 + $0x8] sm:$0xf]
    %v76 = vld [vmem:[%s0 + $0xc] sm:$0xf]
    %v77 = vld [vmem:[%s0 + $0x10] sm:$0xf]
    %v78 = vld [vmem:[%s0 + $0x14] sm:$0xf]
    %v79 = vld [vmem:[%s0 + $0x18] sm:$0xf]
    %v80 = vld [vmem:[%s0 + $0x1c] sm:$0xf]
    %v81 = vld [vmem:[%s0 + $0x20] sm:$0xf]
    %v82 = vperm.slane %v31, 0
    %v92 = vunpack.c.l.b16 %v73
    %v93 = vunpack.c.l.b16 %v74
    %v94 = vunpack.c.l.b16 %v75
    %v95 = vunpack.c.l.b16 %v76
    %v96 = vunpack.c.l.b16 %v77
    %v97 = vunpack.c.l.b16 %v78
    %v98 = vunpack.c.l.b16 %v79
    %v99 = vunpack.c.l.b16 %v80
    %v100 = vunpack.c.l.b16 %v81
    %v101 = vpack.c.b16 %v93, %v92
    %v102 = vpack.c.b16 %v95, %v94
    %v103 = vpack.c.b16 %v97, %v96
    %v104 = vpack.c.b16 %v99, %v98
    %v105 = vpack.c.b16 %v100, %v100
    %v110 = vunpack.c.l.b16 %v33
    %v111 = vunpack.c.l.b16 %v34
    %v112 = vunpack.c.l.b16 %v35
    %v113 = vunpack.c.l.b16 %v36
    %v114 = vpack.c.b16 %v111, %v110
    %v115 = vpack.c.b16 %v113, %v112
    %vm118 = vcmask 261120
    %v120 = vsel %vm118, %v101, 0
    %v123 = vsel %vm118, %v102, 0
    %v126 = vsel %vm118, %v103, 0
    %v129 = vsel %vm118, %v104, 0
    %v132 = vsel %vm118, %v105, 0
    %134 = vmatpush.bf16.msra.mxu0 0
    %135 = vmatpush.bf16.msra.mxu0 0
    %136 = vmatpush.bf16.msra.mxu0 0
    %137 = vmatpush.bf16.msra.mxu0 0
    %138 = vmatpush.bf16.msra.mxu0 0
    %139 = vmatpush.bf16.msra.mxu0 0
    %140 = vmatpush.bf16.msra.mxu0 %v115
    %141 = vmatpush.bf16.msra.mxu0 %v114
    %142 = vmatmul.bf16.gmra.mxu0 %v120
    %v143 = vpop.f32.mrf.mxu0
    %v144 = vadd.f32 %v82, %v143
    %v145 = vpop.f32.mrf.mxu0
    %v146 = vadd.f32 %v82, %v145
    %147 = vmatmul.bf16.gmra.mxu0 %v123
    %v148 = vpop.f32.mrf.mxu0
    %v149 = vadd.f32 %v82, %v148
    %v150 = vpop.f32.mrf.mxu0
    %v151 = vadd.f32 %v82, %v150
    %152 = vmatmul.bf16.gmra.mxu0 %v126
    %v153 = vpop.f32.mrf.mxu0
    %v154 = vadd.f32 %v82, %v153
    %v155 = vpop.f32.mrf.mxu0
    %v156 = vadd.f32 %v82, %v155
    %157 = vmatmul.bf16.gmra.mxu0 %v129
    %v158 = vpop.f32.mrf.mxu0
    %v159 = vadd.f32 %v82, %v158
    %v160 = vpop.f32.mrf.mxu0
    %v161 = vadd.f32 %v82, %v160
    %162 = vmatmul.bf16.gmra.mxu0 %v132
    %v163 = vpop.f32.mrf.mxu0
    %v164 = vadd.f32 %v82, %v163
    %v165 = vpop.f32.mrf.mxu0
    %166 = vdwg.mxu0
    %v167 = vmax.f32 %v144, 0.0
    %v168 = vmax.f32 %v146, 0.0
    %v169 = vmax.f32 %v149, 0.0
    %v170 = vmax.f32 %v151, 0.0
    %v171 = vmax.f32 %v154, 0.0
    %v172 = vmax.f32 %v156, 0.0
    %v173 = vmax.f32 %v159, 0.0
    %v174 = vmax.f32 %v161, 0.0
    %v175 = vmax.f32 %v164, 0.0
    %v176 = vpack.c.bf16 %v168, %v167
    %v177 = vpack.c.bf16 %v170, %v169
    %v178 = vpack.c.bf16 %v172, %v171
    %v179 = vpack.c.bf16 %v174, %v173
    %v180 = vpack.c.bf16 %v175, %v175
    %v181 = vperm.slane %v31, 1
    %v182 = vperm.slane %v32, 1
    %v191 = vunpack.c.l.b16 %v37
    %v192 = vunpack.c.h.b16 %v37
    %v193 = vunpack.c.l.b16 %v38
    %v194 = vunpack.c.h.b16 %v38
    %v195 = vunpack.c.l.b16 %v39
    %v196 = vunpack.c.h.b16 %v39
    %v197 = vunpack.c.l.b16 %v40
    %v198 = vunpack.c.h.b16 %v40
    %v199 = vunpack.c.l.b16 %v41
    %v200 = vunpack.c.h.b16 %v41
    %v201 = vunpack.c.l.b16 %v42
    %v202 = vunpack.c.h.b16 %v42
    %v203 = vunpack.c.l.b16 %v43
    %v204 = vunpack.c.h.b16 %v43
    %v205 = vunpack.c.l.b16 %v44
    %v206 = vunpack.c.h.b16 %v44
    %v207 = vpack.c.b16 %v193, %v191
    %v208 = vpack.c.b16 %v194, %v192
    %v209 = vpack.c.b16 %v197, %v195
    %v210 = vpack.c.b16 %v198, %v196
    %v211 = vpack.c.b16 %v201, %v199
    %v212 = vpack.c.b16 %v202, %v200
    %v213 = vpack.c.b16 %v205, %v203
    %v214 = vpack.c.b16 %v206, %v204
    %vm223 = vcmask 523264
    %v225 = vsel %vm223, %v176, 0
    %v228 = vsel %vm223, %v177, 0
    %v231 = vsel %vm223, %v178, 0
    %v234 = vsel %vm223, %v179, 0
    %v237 = vsel %vm223, %v180, 0
    %239 = vmatpush.bf16.msra.mxu0 0
    %240 = vmatpush.bf16.msra.mxu0 0
    %241 = vmatpush.bf16.msra.mxu0 0
    %242 = vmatpush.bf16.msra.mxu0 0
    %243 = vmatpush.bf16.msra.mxu0 %v213
    %244 = vmatpush.bf16.msra.mxu0 %v211
    %245 = vmatpush.bf16.msra.mxu0 %v209
    %246 = vmatpush.bf16.msra.mxu0 %v207
    %247 = vmatmul.bf16.gmra.mxu0 %v225
    %v248 = vpop.f32.mrf.mxu0
    %v249 = vadd.f32 %v181, %v248
    %v250 = vpop.f32.mrf.mxu0
    %v251 = vadd.f32 %v181, %v250
    %252 = vmatmul.bf16.gmra.mxu0 %v228
    %v253 = vpop.f32.mrf.mxu0
    %v254 = vadd.f32 %v181, %v253
    %v255 = vpop.f32.mrf.mxu0
    %v256 = vadd.f32 %v181, %v255
    %257 = vmatmul.bf16.gmra.mxu0 %v231
    %v258 = vpop.f32.mrf.mxu0
    %v259 = vadd.f32 %v181, %v258
    %v260 = vpop.f32.mrf.mxu0
    %v261 = vadd.f32 %v181, %v260
    %262 = vmatmul.bf16.gmra.mxu0 %v234
    %v263 = vpop.f32.mrf.mxu0
    %v264 = vadd.f32 %v181, %v263
    %v265 = vpop.f32.mrf.mxu0
    %v266 = vadd.f32 %v181, %v265
    %267 = vmatmul.bf16.gmra.mxu0 %v237
    %v268 = vpop.f32.mrf.mxu0
    %v269 = vadd.f32 %v181, %v268
    %v270 = vpop.f32.mrf.mxu0
    %271 = vdwg.mxu0
    %272 = vmatpush.bf16.msra.mxu0 0
    %273 = vmatpush.bf16.msra.mxu0 0
    %274 = vmatpush.bf16.msra.mxu0 0
    %275 = vmatpush.bf16.msra.mxu0 0
    %276 = vmatpush.bf16.msra.mxu0 %v214
    %277 = vmatpush.bf16.msra.mxu0 %v212
    %278 = vmatpush.bf16.msra.mxu0 %v210
    %279 = vmatpush.bf16.msra.mxu0 %v208
    %280 = vmatmul.bf16.gmra.mxu0 %v225
    %v281 = vpop.f32.mrf.mxu0
    %v282 = vadd.f32 %v182, %v281
    %v283 = vpop.f32.mrf.mxu0
    %v284 = vadd.f32 %v182, %v283
    %285 = vmatmul.bf16.gmra.mxu0 %v228
    %v286 = vpop.f32.mrf.mxu0
    %v287 = vadd.f32 %v182, %v286
    %v288 = vpop.f32.mrf.mxu0
    %v289 = vadd.f32 %v182, %v288
    %290 = vmatmul.bf16.gmra.mxu0 %v231
    %v291 = vpop.f32.mrf.mxu0
    %v292 = vadd.f32 %v182, %v291
    %v293 = vpop.f32.mrf.mxu0
    %v294 = vadd.f32 %v182, %v293
    %295 = vmatmul.bf16.gmra.mxu0 %v234
    %v296 = vpop.f32.mrf.mxu0
    %v297 = vadd.f32 %v182, %v296
    %v298 = vpop.f32.mrf.mxu0
    %v299 = vadd.f32 %v182, %v298
    %300 = vmatmul.bf16.gmra.mxu0 %v237
    %v301 = vpop.f32.mrf.mxu0
    %v302 = vadd.f32 %v182, %v301
    %v303 = vpop.f32.mrf.mxu0
    %304 = vdwg.mxu0
    %v305 = vlaneseq
    %v306 = vand.u32 %v305, 127
    %vm307 = vcmp.lt.s32.totalorder %v306, 32
    %v308 = vsel %vm307, 1, 0
    %v309 = vcvt.s32.f32 %v308
    %v310 = vxor.u32 %v249, 2147483648
    %v311 = vxor.u32 %v282, 2147483648
    %v312 = vmul.f32 %v310, 1.442695
    %v313 = vpow.pop %v312
    %v314 = vmul.f32 %v311, 1.442695
    %v315 = vpow.pop %v314
    %v316 = vadd.f32 %v313, 1.0
    %v317 = vadd.f32 %v315, 1.0
    %v318 = vrcp.pop %v316
    %v319 = vmul.f32 %v316, %v318
    %v320 = vsub.f32 1.0, %v319
    %v321 = vmul.f32 %v318, %v320
    %v322 = vadd.f32 %v318, %v321
    %vm323 = vweird.f32 %v316
    %vm324 = vweird.f32 %v318
    %vm325 = vmor %vm323, %vm324
    %v326 = vsel %vm325, %v318, %v322
    %v327 = vand.u32 2147483647, %v316
    %vm328 = vcmp.eq.f32.partialorder %v327, 8.507059e+37
    %v329 = vand.u32 %v316, 2147483648
    %v330 = vor.u32 1.1754944e-38, %v329
    %v331 = vsel %vm328, %v330, %v326
    %v332 = vmul.f32 1.0, %v331
    %v333 = vrcp.pop %v317
    %v334 = vmul.f32 %v317, %v333
    %v335 = vsub.f32 1.0, %v334
    %v336 = vmul.f32 %v333, %v335
    %v337 = vadd.f32 %v333, %v336
    %vm338 = vweird.f32 %v317
    %vm339 = vweird.f32 %v333
    %vm340 = vmor %vm338, %vm339
    %v341 = vsel %vm340, %v333, %v337
    %v342 = vand.u32 2147483647, %v317
    %vm343 = vcmp.eq.f32.partialorder %v342, 8.507059e+37
    %v344 = vand.u32 %v317, 2147483648
    %v345 = vor.u32 1.1754944e-38, %v344
    %v346 = vsel %vm343, %v345, %v341
    %v347 = vmul.f32 1.0, %v346
    %v348 = vtanh.pop %v282
    %v349 = vmul.f32 %v332, 0.0
    %v350 = vmul.f32 %v332, %v348
    %352 = vrot.lane.b32.xlu0 %v350, 64
    %v353 = vpop.permute.xlu0 %352
    %v355 = vadd.f32 %v349, %v353
    %v356 = vtanh.pop %v355
    %v357 = vmul.f32 %v347, %v356
    %359 = vrot.lane.b32.xlu0 %v309, 64
    %v360 = vpop.permute.xlu0 %359
    %v362 = vmul.f32 %v357, %v360
    %v363 = vmul.f32 %v355, %v360
    %v364 = vpack.c.bf16 %v362, %v362
    %366 = vrot.lane.b32.xlu0 %v364, 64
    %v367 = vpop.permute.xlu0 %366
    %v376 = vunpack.c.l.b16 %v45
    %v377 = vunpack.c.h.b16 %v45
    %v378 = vunpack.c.l.b16 %v46
    %v379 = vunpack.c.h.b16 %v46
    %v380 = vunpack.c.l.b16 %v47
    %v381 = vunpack.c.h.b16 %v47
    %v382 = vunpack.c.l.b16 %v48
    %v383 = vunpack.c.h.b16 %v48
    %v384 = vunpack.c.l.b16 %v49
    %v385 = vunpack.c.h.b16 %v49
    %v386 = vunpack.c.l.b16 %v50
    %v387 = vunpack.c.h.b16 %v50
    %v388 = vunpack.c.l.b16 %v51
    %v389 = vunpack.c.h.b16 %v51
    %v390 = vunpack.c.l.b16 %v52
    %v391 = vunpack.c.h.b16 %v52
    %v392 = vpack.c.b16 %v378, %v376
    %v393 = vpack.c.b16 %v379, %v377
    %v394 = vpack.c.b16 %v382, %v380
    %v395 = vpack.c.b16 %v383, %v381
    %v396 = vpack.c.b16 %v386, %v384
    %v397 = vpack.c.b16 %v387, %v385
    %v398 = vpack.c.b16 %v390, %v388
    %v399 = vpack.c.b16 %v391, %v389
    %v409 = vsel %vm223, %v367, 0
    %411 = vmatpush.bf16.msra.mxu0 0
    %412 = vmatpush.bf16.msra.mxu0 0
    %413 = vmatpush.bf16.msra.mxu0 0
    %414 = vmatpush.bf16.msra.mxu0 0
    %415 = vmatpush.bf16.msra.mxu0 %v398
    %416 = vmatpush.bf16.msra.mxu0 %v396
    %417 = vmatpush.bf16.msra.mxu0 %v394
    %418 = vmatpush.bf16.msra.mxu0 %v392
    %419 = vmatmul.bf16.gmra.mxu0 %v409
    %v420 = vpop.f32.mrf.mxu0
    %v421 = vadd.f32 0.0, %v420
    %v422 = vpop.f32.mrf.mxu0
    %423 = vdwg.mxu0
    %424 = vmatpush.bf16.msra.mxu0 0
    %425 = vmatpush.bf16.msra.mxu0 0
    %426 = vmatpush.bf16.msra.mxu0 0
    %427 = vmatpush.bf16.msra.mxu0 0
    %428 = vmatpush.bf16.msra.mxu0 %v399
    %429 = vmatpush.bf16.msra.mxu0 %v397
    %430 = vmatpush.bf16.msra.mxu0 %v395
    %431 = vmatpush.bf16.msra.mxu0 %v393
    %432 = vmatmul.bf16.gmra.mxu0 %v409
    %v433 = vpop.f32.mrf.mxu0
    %v434 = vadd.f32 0.0, %v433
    %v435 = vpop.f32.mrf.mxu0
    %436 = vdwg.mxu0
    %v437 = vadd.f32 %v251, %v421
    %v438 = vadd.f32 %v284, %v434
    %v439 = vxor.u32 %v437, 2147483648
    %v440 = vxor.u32 %v438, 2147483648
    %v441 = vmul.f32 %v439, 1.442695
    %v442 = vpow.pop %v441
    %v443 = vmul.f32 %v440, 1.442695
    %v444 = vpow.pop %v443
    %v445 = vadd.f32 %v442, 1.0
    %v446 = vadd.f32 %v444, 1.0
    %v447 = vrcp.pop %v445
    %v448 = vmul.f32 %v445, %v447
    %v449 = vsub.f32 1.0, %v448
    %v450 = vmul.f32 %v447, %v449
    %v451 = vadd.f32 %v447, %v450
    %vm452 = vweird.f32 %v445
    %vm453 = vweird.f32 %v447
    %vm454 = vmor %vm452, %vm453
    %v455 = vsel %vm454, %v447, %v451
    %v456 = vand.u32 2147483647, %v445
    %vm457 = vcmp.eq.f32.partialorder %v456, 8.507059e+37
    %v458 = vand.u32 %v445, 2147483648
    %v459 = vor.u32 1.1754944e-38, %v458
    %v460 = vsel %vm457, %v459, %v455
    %v461 = vmul.f32 1.0, %v460
    %v462 = vrcp.pop %v446
    %v463 = vmul.f32 %v446, %v462
    %v464 = vsub.f32 1.0, %v463
    %v465 = vmul.f32 %v462, %v464
    %v466 = vadd.f32 %v462, %v465
    %vm467 = vweird.f32 %v446
    %vm468 = vweird.f32 %v462
    %vm469 = vmor %vm467, %vm468
    %v470 = vsel %vm469, %v462, %v466
    %v471 = vand.u32 2147483647, %v446
    %vm472 = vcmp.eq.f32.partialorder %v471, 8.507059e+37
    %v473 = vand.u32 %v446, 2147483648
    %v474 = vor.u32 1.1754944e-38, %v473
    %v475 = vsel %vm472, %v474, %v470
    %v476 = vmul.f32 1.0, %v475
    %v477 = vtanh.pop %v438
    %v478 = vmul.f32 %v461, %v363
    %v479 = vmul.f32 %v461, %v477
    %481 = vrot.lane.b32.xlu0 %v479, 64
    %v482 = vpop.permute.xlu0 %481
    %v484 = vadd.f32 %v478, %v482
    %v485 = vtanh.pop %v484
    %v486 = vmul.f32 %v476, %v485
    %v487 = vpack.c.bf16 %v486, %v486
    %489 = vrot.lane.b32.xlu0 %v487, 64
    %v490 = vpop.permute.xlu0 %489
    %v492 = vsel %vm223, %v490, 0
    %494 = vmatpush.bf16.msra.mxu0 0
    %495 = vmatpush.bf16.msra.mxu0 0
    %496 = vmatpush.bf16.msra.mxu0 0
    %497 = vmatpush.bf16.msra.mxu0 0
    %498 = vmatpush.bf16.msra.mxu0 %v398
    %499 = vmatpush.bf16.msra.mxu0 %v396
    %500 = vmatpush.bf16.msra.mxu0 %v394
    %501 = vmatpush.bf16.msra.mxu0 %v392
    %502 = vmatmul.bf16.gmra.mxu0 %v492
    %v503 = vpop.f32.mrf.mxu0
    %v504 = vadd.f32 0.0, %v503
    %v505 = vpop.f32.mrf.mxu0
    %506 = vdwg.mxu0
    %507 = vmatpush.bf16.msra.mxu0 0
    %508 = vmatpush.bf16.msra.mxu0 0
    %509 = vmatpush.bf16.msra.mxu0 0
    %510 = vmatpush.bf16.msra.mxu0 0
    %511 = vmatpush.bf16.msra.mxu0 %v399
    %512 = vmatpush.bf16.msra.mxu0 %v397
    %513 = vmatpush.bf16.msra.mxu0 %v395
    %514 = vmatpush.bf16.msra.mxu0 %v393
    %515 = vmatmul.bf16.gmra.mxu0 %v492
    %v516 = vpop.f32.mrf.mxu0
    %v517 = vadd.f32 0.0, %v516
    %v518 = vpop.f32.mrf.mxu0
    %519 = vdwg.mxu0
    %v520 = vadd.f32 %v254, %v504
    %v521 = vadd.f32 %v287, %v517
    %v522 = vxor.u32 %v520, 2147483648
    %v523 = vxor.u32 %v521, 2147483648
    %v524 = vmul.f32 %v522, 1.442695
    %v525 = vpow.pop %v524
    %v526 = vmul.f32 %v523, 1.442695
    %v527 = vpow.pop %v526
    %v528 = vadd.f32 %v525, 1.0
    %v529 = vadd.f32 %v527, 1.0
    %v530 = vrcp.pop %v528
    %v531 = vmul.f32 %v528, %v530
    %v532 = vsub.f32 1.0, %v531
    %v533 = vmul.f32 %v530, %v532
    %v534 = vadd.f32 %v530, %v533
    %vm535 = vweird.f32 %v528
    %vm536 = vweird.f32 %v530
    %vm537 = vmor %vm535, %vm536
    %v538 = vsel %vm537, %v530, %v534
    %v539 = vand.u32 2147483647, %v528
    %vm540 = vcmp.eq.f32.partialorder %v539, 8.507059e+37
    %v541 = vand.u32 %v528, 2147483648
    %v542 = vor.u32 1.1754944e-38, %v541
    %v543 = vsel %vm540, %v542, %v538
    %v544 = vmul.f32 1.0, %v543
    %v545 = vrcp.pop %v529
    %v546 = vmul.f32 %v529, %v545
    %v547 = vsub.f32 1.0, %v546
    %v548 = vmul.f32 %v545, %v547
    %v549 = vadd.f32 %v545, %v548
    %vm550 = vweird.f32 %v529
    %vm551 = vweird.f32 %v545
    %vm552 = vmor %vm550, %vm551
    %v553 = vsel %vm552, %v545, %v549
    %v554 = vand.u32 2147483647, %v529
    %vm555 = vcmp.eq.f32.partialorder %v554, 8.507059e+37
    %v556 = vand.u32 %v529, 2147483648
    %v557 = vor.u32 1.1754944e-38, %v556
    %v558 = vsel %vm555, %v557, %v553
    %v559 = vmul.f32 1.0, %v558
    %v560 = vtanh.pop %v521
    %v561 = vmul.f32 %v544, %v484
    %v562 = vmul.f32 %v544, %v560
    %564 = vrot.lane.b32.xlu0 %v562, 64
    %v565 = vpop.permute.xlu0 %564
    %v567 = vadd.f32 %v561, %v565
    %v568 = vtanh.pop %v567
    %v569 = vmul.f32 %v559, %v568
    %v570 = vpack.c.bf16 %v569, %v569
    %572 = vrot.lane.b32.xlu0 %v570, 64
    %v573 = vpop.permute.xlu0 %572
    %v575 = vsel %vm223, %v573, 0
    %577 = vmatpush.bf16.msra.mxu0 0
    %578 = vmatpush.bf16.msra.mxu0 0
    %579 = vmatpush.bf16.msra.mxu0 0
    %580 = vmatpush.bf16.msra.mxu0 0
    %581 = vmatpush.bf16.msra.mxu0 %v398
    %582 = vmatpush.bf16.msra.mxu0 %v396
    %583 = vmatpush.bf16.msra.mxu0 %v394
    %584 = vmatpush.bf16.msra.mxu0 %v392
    %585 = vmatmul.bf16.gmra.mxu0 %v575
    %v586 = vpop.f32.mrf.mxu0
    %v587 = vadd.f32 0.0, %v586
    %v588 = vpop.f32.mrf.mxu0
    %589 = vdwg.mxu0
    %590 = vmatpush.bf16.msra.mxu0 0
    %591 = vmatpush.bf16.msra.mxu0 0
    %592 = vmatpush.bf16.msra.mxu0 0
    %593 = vmatpush.bf16.msra.mxu0 0
    %594 = vmatpush.bf16.msra.mxu0 %v399
    %595 = vmatpush.bf16.msra.mxu0 %v397
    %596 = vmatpush.bf16.msra.mxu0 %v395
    %597 = vmatpush.bf16.msra.mxu0 %v393
    %598 = vmatmul.bf16.gmra.mxu0 %v575
    %v599 = vpop.f32.mrf.mxu0
    %v600 = vadd.f32 0.0, %v599
    %v601 = vpop.f32.mrf.mxu0
    %602 = vdwg.mxu0
    %v603 = vadd.f32 %v256, %v587
    %v604 = vadd.f32 %v289, %v600
    %v605 = vxor.u32 %v603, 2147483648
    %v606 = vxor.u32 %v604, 2147483648
    %v607 = vmul.f32 %v605, 1.442695
    %v608 = vpow.pop %v607
    %v609 = vmul.f32 %v606, 1.442695
    %v610 = vpow.pop %v609
    %v611 = vadd.f32 %v608, 1.0
    %v612 = vadd.f32 %v610, 1.0
    %v613 = vrcp.pop %v611
    %v614 = vmul.f32 %v611, %v613
    %v615 = vsub.f32 1.0, %v614
    %v616 = vmul.f32 %v613, %v615
    %v617 = vadd.f32 %v613, %v616
    %vm618 = vweird.f32 %v611
    %vm619 = vweird.f32 %v613
    %vm620 = vmor %vm618, %vm619
    %v621 = vsel %vm620, %v613, %v617
    %v622 = vand.u32 2147483647, %v611
    %vm623 = vcmp.eq.f32.partialorder %v622, 8.507059e+37
    %v624 = vand.u32 %v611, 2147483648
    %v625 = vor.u32 1.1754944e-38, %v624
    %v626 = vsel %vm623, %v625, %v621
    %v627 = vmul.f32 1.0, %v626
    %v628 = vrcp.pop %v612
    %v629 = vmul.f32 %v612, %v628
    %v630 = vsub.f32 1.0, %v629
    %v631 = vmul.f32 %v628, %v630
    %v632 = vadd.f32 %v628, %v631
    %vm633 = vweird.f32 %v612
    %vm634 = vweird.f32 %v628
    %vm635 = vmor %vm633, %vm634
    %v636 = vsel %vm635, %v628, %v632
    %v637 = vand.u32 2147483647, %v612
    %vm638 = vcmp.eq.f32.partialorder %v637, 8.507059e+37
    %v639 = vand.u32 %v612, 2147483648
    %v640 = vor.u32 1.1754944e-38, %v639
    %v641 = vsel %vm638, %v640, %v636
    %v642 = vmul.f32 1.0, %v641
    %v643 = vtanh.pop %v604
    %v644 = vmul.f32 %v627, %v567
    %v645 = vmul.f32 %v627, %v643
    %647 = vrot.lane.b32.xlu0 %v645, 64
    %v648 = vpop.permute.xlu0 %647
    %v650 = vadd.f32 %v644, %v648
    %v651 = vtanh.pop %v650
    %v652 = vmul.f32 %v642, %v651
    %v653 = vpack.c.bf16 %v652, %v652
    %655 = vrot.lane.b32.xlu0 %v653, 64
    %v656 = vpop.permute.xlu0 %655
    %v658 = vsel %vm223, %v656, 0
    %660 = vmatpush.bf16.msra.mxu0 0
    %661 = vmatpush.bf16.msra.mxu0 0
    %662 = vmatpush.bf16.msra.mxu0 0
    %663 = vmatpush.bf16.msra.mxu0 0
    %664 = vmatpush.bf16.msra.mxu0 %v398
    %665 = vmatpush.bf16.msra.mxu0 %v396
    %666 = vmatpush.bf16.msra.mxu0 %v394
    %667 = vmatpush.bf16.msra.mxu0 %v392
    %668 = vmatmul.bf16.gmra.mxu0 %v658
    %v669 = vpop.f32.mrf.mxu0
    %v670 = vadd.f32 0.0, %v669
    %v671 = vpop.f32.mrf.mxu0
    %672 = vdwg.mxu0
    %673 = vmatpush.bf16.msra.mxu0 0
    %674 = vmatpush.bf16.msra.mxu0 0
    %675 = vmatpush.bf16.msra.mxu0 0
    %676 = vmatpush.bf16.msra.mxu0 0
    %677 = vmatpush.bf16.msra.mxu0 %v399
    %678 = vmatpush.bf16.msra.mxu0 %v397
    %679 = vmatpush.bf16.msra.mxu0 %v395
    %680 = vmatpush.bf16.msra.mxu0 %v393
    %681 = vmatmul.bf16.gmra.mxu0 %v658
    %v682 = vpop.f32.mrf.mxu0
    %v683 = vadd.f32 0.0, %v682
    %v684 = vpop.f32.mrf.mxu0
    %685 = vdwg.mxu0
    %v686 = vadd.f32 %v259, %v670
    %v687 = vadd.f32 %v292, %v683
    %v688 = vxor.u32 %v686, 2147483648
    %v689 = vxor.u32 %v687, 2147483648
    %v690 = vmul.f32 %v688, 1.442695
    %v691 = vpow.pop %v690
    %v692 = vmul.f32 %v689, 1.442695
    %v693 = vpow.pop %v692
    %v694 = vadd.f32 %v691, 1.0
    %v695 = vadd.f32 %v693, 1.0
    %v696 = vrcp.pop %v694
    %v697 = vmul.f32 %v694, %v696
    %v698 = vsub.f32 1.0, %v697
    %v699 = vmul.f32 %v696, %v698
    %v700 = vadd.f32 %v696, %v699
    %vm701 = vweird.f32 %v694
    %vm702 = vweird.f32 %v696
    %vm703 = vmor %vm701, %vm702
    %v704 = vsel %vm703, %v696, %v700
    %v705 = vand.u32 2147483647, %v694
    %vm706 = vcmp.eq.f32.partialorder %v705, 8.507059e+37
    %v707 = vand.u32 %v694, 2147483648
    %v708 = vor.u32 1.1754944e-38, %v707
    %v709 = vsel %vm706, %v708, %v704
    %v710 = vmul.f32 1.0, %v709
    %v711 = vrcp.pop %v695
    %v712 = vmul.f32 %v695, %v711
    %v713 = vsub.f32 1.0, %v712
    %v714 = vmul.f32 %v711, %v713
    %v715 = vadd.f32 %v711, %v714
    %vm716 = vweird.f32 %v695
    %vm717 = vweird.f32 %v711
    %vm718 = vmor %vm716, %vm717
    %v719 = vsel %vm718, %v711, %v715
    %v720 = vand.u32 2147483647, %v695
    %vm721 = vcmp.eq.f32.partialorder %v720, 8.507059e+37
    %v722 = vand.u32 %v695, 2147483648
    %v723 = vor.u32 1.1754944e-38, %v722
    %v724 = vsel %vm721, %v723, %v719
    %v725 = vmul.f32 1.0, %v724
    %v726 = vtanh.pop %v687
    %v727 = vmul.f32 %v710, %v650
    %v728 = vmul.f32 %v710, %v726
    %730 = vrot.lane.b32.xlu0 %v728, 64
    %v731 = vpop.permute.xlu0 %730
    %v733 = vadd.f32 %v727, %v731
    %v734 = vtanh.pop %v733
    %v735 = vmul.f32 %v725, %v734
    %v736 = vpack.c.bf16 %v735, %v735
    %738 = vrot.lane.b32.xlu0 %v736, 64
    %v739 = vpop.permute.xlu0 %738
    %v741 = vsel %vm223, %v739, 0
    %743 = vmatpush.bf16.msra.mxu0 0
    %744 = vmatpush.bf16.msra.mxu0 0
    %745 = vmatpush.bf16.msra.mxu0 0
    %746 = vmatpush.bf16.msra.mxu0 0
    %747 = vmatpush.bf16.msra.mxu0 %v398
    %748 = vmatpush.bf16.msra.mxu0 %v396
    %749 = vmatpush.bf16.msra.mxu0 %v394
    %750 = vmatpush.bf16.msra.mxu0 %v392
    %751 = vmatmul.bf16.gmra.mxu0 %v741
    %v752 = vpop.f32.mrf.mxu0
    %v753 = vadd.f32 0.0, %v752
    %v754 = vpop.f32.mrf.mxu0
    %755 = vdwg.mxu0
    %756 = vmatpush.bf16.msra.mxu0 0
    %757 = vmatpush.bf16.msra.mxu0 0
    %758 = vmatpush.bf16.msra.mxu0 0
    %759 = vmatpush.bf16.msra.mxu0 0
    %760 = vmatpush.bf16.msra.mxu0 %v399
    %761 = vmatpush.bf16.msra.mxu0 %v397
    %762 = vmatpush.bf16.msra.mxu0 %v395
    %763 = vmatpush.bf16.msra.mxu0 %v393
    %764 = vmatmul.bf16.gmra.mxu0 %v741
    %v765 = vpop.f32.mrf.mxu0
    %v766 = vadd.f32 0.0, %v765
    %v767 = vpop.f32.mrf.mxu0
    %768 = vdwg.mxu0
    %v769 = vadd.f32 %v261, %v753
    %v770 = vadd.f32 %v294, %v766
    %v771 = vxor.u32 %v769, 2147483648
    %v772 = vxor.u32 %v770, 2147483648
    %v773 = vmul.f32 %v771, 1.442695
    %v774 = vpow.pop %v773
    %v775 = vmul.f32 %v772, 1.442695
    %v776 = vpow.pop %v775
    %v777 = vadd.f32 %v774, 1.0
    %v778 = vadd.f32 %v776, 1.0
    %v779 = vrcp.pop %v777
    %v780 = vmul.f32 %v777, %v779
    %v781 = vsub.f32 1.0, %v780
    %v782 = vmul.f32 %v779, %v781
    %v783 = vadd.f32 %v779, %v782
    %vm784 = vweird.f32 %v777
    %vm785 = vweird.f32 %v779
    %vm786 = vmor %vm784, %vm785
    %v787 = vsel %vm786, %v779, %v783
    %v788 = vand.u32 2147483647, %v777
    %vm789 = vcmp.eq.f32.partialorder %v788, 8.507059e+37
    %v790 = vand.u32 %v777, 2147483648
    %v791 = vor.u32 1.1754944e-38, %v790
    %v792 = vsel %vm789, %v791, %v787
    %v793 = vmul.f32 1.0, %v792
    %v794 = vrcp.pop %v778
    %v795 = vmul.f32 %v778, %v794
    %v796 = vsub.f32 1.0, %v795
    %v797 = vmul.f32 %v794, %v796
    %v798 = vadd.f32 %v794, %v797
    %vm799 = vweird.f32 %v778
    %vm800 = vweird.f32 %v794
    %vm801 = vmor %vm799, %vm800
    %v802 = vsel %vm801, %v794, %v798
    %v803 = vand.u32 2147483647, %v778
    %vm804 = vcmp.eq.f32.partialorder %v803, 8.507059e+37
    %v805 = vand.u32 %v778, 2147483648
    %v806 = vor.u32 1.1754944e-38, %v805
    %v807 = vsel %vm804, %v806, %v802
    %v808 = vmul.f32 1.0, %v807
    %v809 = vtanh.pop %v770
    %v810 = vmul.f32 %v793, %v733
    %v811 = vmul.f32 %v793, %v809
    %813 = vrot.lane.b32.xlu0 %v811, 64
    %v814 = vpop.permute.xlu0 %813
    %v816 = vadd.f32 %v810, %v814
    %v817 = vtanh.pop %v816
    %v818 = vmul.f32 %v808, %v817
    %v819 = vpack.c.bf16 %v818, %v818
    %821 = vrot.lane.b32.xlu0 %v819, 64
    %v822 = vpop.permute.xlu0 %821
    %v824 = vsel %vm223, %v822, 0
    %826 = vmatpush.bf16.msra.mxu0 0
    %827 = vmatpush.bf16.msra.mxu0 0
    %828 = vmatpush.bf16.msra.mxu0 0
    %829 = vmatpush.bf16.msra.mxu0 0
    %830 = vmatpush.bf16.msra.mxu0 %v398
    %831 = vmatpush.bf16.msra.mxu0 %v396
    %832 = vmatpush.bf16.msra.mxu0 %v394
    %833 = vmatpush.bf16.msra.mxu0 %v392
    %834 = vmatmul.bf16.gmra.mxu0 %v824
    %v835 = vpop.f32.mrf.mxu0
    %v836 = vadd.f32 0.0, %v835
    %v837 = vpop.f32.mrf.mxu0
    %838 = vdwg.mxu0
    %839 = vmatpush.bf16.msra.mxu0 0
    %840 = vmatpush.bf16.msra.mxu0 0
    %841 = vmatpush.bf16.msra.mxu0 0
    %842 = vmatpush.bf16.msra.mxu0 0
    %843 = vmatpush.bf16.msra.mxu0 %v399
    %844 = vmatpush.bf16.msra.mxu0 %v397
    %845 = vmatpush.bf16.msra.mxu0 %v395
    %846 = vmatpush.bf16.msra.mxu0 %v393
    %847 = vmatmul.bf16.gmra.mxu0 %v824
    %v848 = vpop.f32.mrf.mxu0
    %v849 = vadd.f32 0.0, %v848
    %v850 = vpop.f32.mrf.mxu0
    %851 = vdwg.mxu0
    %v852 = vadd.f32 %v264, %v836
    %v853 = vadd.f32 %v297, %v849
    %v854 = vxor.u32 %v852, 2147483648
    %v855 = vxor.u32 %v853, 2147483648
    %v856 = vmul.f32 %v854, 1.442695
    %v857 = vpow.pop %v856
    %v858 = vmul.f32 %v855, 1.442695
    %v859 = vpow.pop %v858
    %v860 = vadd.f32 %v857, 1.0
    %v861 = vadd.f32 %v859, 1.0
    %v862 = vrcp.pop %v860
    %v863 = vmul.f32 %v860, %v862
    %v864 = vsub.f32 1.0, %v863
    %v865 = vmul.f32 %v862, %v864
    %v866 = vadd.f32 %v862, %v865
    %vm867 = vweird.f32 %v860
    %vm868 = vweird.f32 %v862
    %vm869 = vmor %vm867, %vm868
    %v870 = vsel %vm869, %v862, %v866
    %v871 = vand.u32 2147483647, %v860
    %vm872 = vcmp.eq.f32.partialorder %v871, 8.507059e+37
    %v873 = vand.u32 %v860, 2147483648
    %v874 = vor.u32 1.1754944e-38, %v873
    %v875 = vsel %vm872, %v874, %v870
    %v876 = vmul.f32 1.0, %v875
    %v877 = vrcp.pop %v861
    %v878 = vmul.f32 %v861, %v877
    %v879 = vsub.f32 1.0, %v878
    %v880 = vmul.f32 %v877, %v879
    %v881 = vadd.f32 %v877, %v880
    %vm882 = vweird.f32 %v861
    %vm883 = vweird.f32 %v877
    %vm884 = vmor %vm882, %vm883
    %v885 = vsel %vm884, %v877, %v881
    %v886 = vand.u32 2147483647, %v861
    %vm887 = vcmp.eq.f32.partialorder %v886, 8.507059e+37
    %v888 = vand.u32 %v861, 2147483648
    %v889 = vor.u32 1.1754944e-38, %v888
    %v890 = vsel %vm887, %v889, %v885
    %v891 = vmul.f32 1.0, %v890
    %v892 = vtanh.pop %v853
    %v893 = vmul.f32 %v876, %v816
    %v894 = vmul.f32 %v876, %v892
    %896 = vrot.lane.b32.xlu0 %v894, 64
    %v897 = vpop.permute.xlu0 %896
    %v899 = vadd.f32 %v893, %v897
    %v900 = vtanh.pop %v899
    %v901 = vmul.f32 %v891, %v900
    %v902 = vpack.c.bf16 %v901, %v901
    %904 = vrot.lane.b32.xlu0 %v902, 64
    %v905 = vpop.permute.xlu0 %904
    %v907 = vsel %vm223, %v905, 0
    %909 = vmatpush.bf16.msra.mxu0 0
    %910 = vmatpush.bf16.msra.mxu0 0
    %911 = vmatpush.bf16.msra.mxu0 0
    %912 = vmatpush.bf16.msra.mxu0 0
    %913 = vmatpush.bf16.msra.mxu0 %v398
    %914 = vmatpush.bf16.msra.mxu0 %v396
    %915 = vmatpush.bf16.msra.mxu0 %v394
    %916 = vmatpush.bf16.msra.mxu0 %v392
    %917 = vmatmul.bf16.gmra.mxu0 %v907
    %v918 = vpop.f32.mrf.mxu0
    %v919 = vadd.f32 0.0, %v918
    %v920 = vpop.f32.mrf.mxu0
    %921 = vdwg.mxu0
    %922 = vmatpush.bf16.msra.mxu0 0
    %923 = vmatpush.bf16.msra.mxu0 0
    %924 = vmatpush.bf16.msra.mxu0 0
    %925 = vmatpush.bf16.msra.mxu0 0
    %926 = vmatpush.bf16.msra.mxu0 %v399
    %927 = vmatpush.bf16.msra.mxu0 %v397
    %928 = vmatpush.bf16.msra.mxu0 %v395
    %929 = vmatpush.bf16.msra.mxu0 %v393
    %930 = vmatmul.bf16.gmra.mxu0 %v907
    %v931 = vpop.f32.mrf.mxu0
    %v932 = vadd.f32 0.0, %v931
    %v933 = vpop.f32.mrf.mxu0
    %934 = vdwg.mxu0
    %v935 = vadd.f32 %v266, %v919
    %v936 = vadd.f32 %v299, %v932
    %v937 = vxor.u32 %v935, 2147483648
    %v938 = vxor.u32 %v936, 2147483648
    %v939 = vmul.f32 %v937, 1.442695
    %v940 = vpow.pop %v939
    %v941 = vmul.f32 %v938, 1.442695
    %v942 = vpow.pop %v941
    %v943 = vadd.f32 %v940, 1.0
    %v944 = vadd.f32 %v942, 1.0
    %v945 = vrcp.pop %v943
    %v946 = vmul.f32 %v943, %v945
    %v947 = vsub.f32 1.0, %v946
    %v948 = vmul.f32 %v945, %v947
    %v949 = vadd.f32 %v945, %v948
    %vm950 = vweird.f32 %v943
    %vm951 = vweird.f32 %v945
    %vm952 = vmor %vm950, %vm951
    %v953 = vsel %vm952, %v945, %v949
    %v954 = vand.u32 2147483647, %v943
    %vm955 = vcmp.eq.f32.partialorder %v954, 8.507059e+37
    %v956 = vand.u32 %v943, 2147483648
    %v957 = vor.u32 1.1754944e-38, %v956
    %v958 = vsel %vm955, %v957, %v953
    %v959 = vmul.f32 1.0, %v958
    %v960 = vrcp.pop %v944
    %v961 = vmul.f32 %v944, %v960
    %v962 = vsub.f32 1.0, %v961
    %v963 = vmul.f32 %v960, %v962
    %v964 = vadd.f32 %v960, %v963
    %vm965 = vweird.f32 %v944
    %vm966 = vweird.f32 %v960
    %vm967 = vmor %vm965, %vm966
    %v968 = vsel %vm967, %v960, %v964
    %v969 = vand.u32 2147483647, %v944
    %vm970 = vcmp.eq.f32.partialorder %v969, 8.507059e+37
    %v971 = vand.u32 %v944, 2147483648
    %v972 = vor.u32 1.1754944e-38, %v971
    %v973 = vsel %vm970, %v972, %v968
    %v974 = vmul.f32 1.0, %v973
    %v975 = vtanh.pop %v936
    %v976 = vmul.f32 %v959, %v899
    %v977 = vmul.f32 %v959, %v975
    %979 = vrot.lane.b32.xlu0 %v977, 64
    %v980 = vpop.permute.xlu0 %979
    %v982 = vadd.f32 %v976, %v980
    %v983 = vtanh.pop %v982
    %v984 = vmul.f32 %v974, %v983
    %v985 = vpack.c.bf16 %v984, %v984
    %987 = vrot.lane.b32.xlu0 %v985, 64
    %v988 = vpop.permute.xlu0 %987
    %v990 = vsel %vm223, %v988, 0
    %992 = vmatpush.bf16.msra.mxu0 0
    %993 = vmatpush.bf16.msra.mxu0 0
    %994 = vmatpush.bf16.msra.mxu0 0
    %995 = vmatpush.bf16.msra.mxu0 0
    %996 = vmatpush.bf16.msra.mxu0 %v398
    %997 = vmatpush.bf16.msra.mxu0 %v396
    %998 = vmatpush.bf16.msra.mxu0 %v394
    %999 = vmatpush.bf16.msra.mxu0 %v392
    %1000 = vmatmul.bf16.gmra.mxu0 %v990
    %v1001 = vpop.f32.mrf.mxu0
    %v1002 = vadd.f32 0.0, %v1001
    %v1003 = vpop.f32.mrf.mxu0
    %1004 = vdwg.mxu0
    %1005 = vmatpush.bf16.msra.mxu0 0
    %1006 = vmatpush.bf16.msra.mxu0 0
    %1007 = vmatpush.bf16.msra.mxu0 0
    %1008 = vmatpush.bf16.msra.mxu0 0
    %1009 = vmatpush.bf16.msra.mxu0 %v399
    %1010 = vmatpush.bf16.msra.mxu0 %v397
    %1011 = vmatpush.bf16.msra.mxu0 %v395
    %1012 = vmatpush.bf16.msra.mxu0 %v393
    %1013 = vmatmul.bf16.gmra.mxu0 %v990
    %v1014 = vpop.f32.mrf.mxu0
    %v1015 = vadd.f32 0.0, %v1014
    %v1016 = vpop.f32.mrf.mxu0
    %1017 = vdwg.mxu0
    %v1018 = vadd.f32 %v269, %v1002
    %v1019 = vadd.f32 %v302, %v1015
    %v1020 = vxor.u32 %v1018, 2147483648
    %v1021 = vxor.u32 %v1019, 2147483648
    %v1022 = vmul.f32 %v1020, 1.442695
    %v1023 = vpow.pop %v1022
    %v1024 = vmul.f32 %v1021, 1.442695
    %v1025 = vpow.pop %v1024
    %v1026 = vadd.f32 %v1023, 1.0
    %v1027 = vadd.f32 %v1025, 1.0
    %v1028 = vrcp.pop %v1026
    %v1029 = vmul.f32 %v1026, %v1028
    %v1030 = vsub.f32 1.0, %v1029
    %v1031 = vmul.f32 %v1028, %v1030
    %v1032 = vadd.f32 %v1028, %v1031
    %vm1033 = vweird.f32 %v1026
    %vm1034 = vweird.f32 %v1028
    %vm1035 = vmor %vm1033, %vm1034
    %v1036 = vsel %vm1035, %v1028, %v1032
    %v1037 = vand.u32 2147483647, %v1026
    %vm1038 = vcmp.eq.f32.partialorder %v1037, 8.507059e+37
    %v1039 = vand.u32 %v1026, 2147483648
    %v1040 = vor.u32 1.1754944e-38, %v1039
    %v1041 = vsel %vm1038, %v1040, %v1036
    %v1042 = vmul.f32 1.0, %v1041
    %v1043 = vrcp.pop %v1027
    %v1044 = vmul.f32 %v1027, %v1043
    %v1045 = vsub.f32 1.0, %v1044
    %v1046 = vmul.f32 %v1043, %v1045
    %v1047 = vadd.f32 %v1043, %v1046
    %vm1048 = vweird.f32 %v1027
    %vm1049 = vweird.f32 %v1043
    %vm1050 = vmor %vm1048, %vm1049
    %v1051 = vsel %vm1050, %v1043, %v1047
    %v1052 = vand.u32 2147483647, %v1027
    %vm1053 = vcmp.eq.f32.partialorder %v1052, 8.507059e+37
    %v1054 = vand.u32 %v1027, 2147483648
    %v1055 = vor.u32 1.1754944e-38, %v1054
    %v1056 = vsel %vm1053, %v1055, %v1051
    %v1057 = vmul.f32 1.0, %v1056
    %v1058 = vtanh.pop %v1019
    %v1059 = vmul.f32 %v1042, %v982
    %v1060 = vmul.f32 %v1042, %v1058
    %1062 = vrot.lane.b32.xlu0 %v1060, 64
    %v1063 = vpop.permute.xlu0 %1062
    %v1065 = vadd.f32 %v1059, %v1063
    %v1066 = vtanh.pop %v1065
    %v1067 = vmul.f32 %v1057, %v1066
    %v1068 = vpack.c.bf16 %v1067, %v1067
    %v1069 = vperm.slane %v31, 2
    %1071 = vrot.lane.b32.xlu0 %v1068, 32
    %v1072 = vpop.permute.xlu0 %1071
    %v1077 = vunpack.c.l.b16 %v53
    %v1078 = vunpack.c.l.b16 %v54
    %v1079 = vunpack.c.l.b16 %v55
    %v1080 = vunpack.c.l.b16 %v56
    %v1081 = vpack.c.b16 %v1078, %v1077
    %v1082 = vpack.c.b16 %v1080, %v1079
    %v1086 = vsel %vm118, %v1072, 0
    %1088 = vmatpush.bf16.msra.mxu0 0
    %1089 = vmatpush.bf16.msra.mxu0 0
    %1090 = vmatpush.bf16.msra.mxu0 0
    %1091 = vmatpush.bf16.msra.mxu0 0
    %1092 = vmatpush.bf16.msra.mxu0 0
    %1093 = vmatpush.bf16.msra.mxu0 0
    %1094 = vmatpush.bf16.msra.mxu0 %v1082
    %1095 = vmatpush.bf16.msra.mxu0 %v1081
    %1096 = vmatmul.bf16.gmra.mxu0 %v1086
    %v1097 = vpop.f32.mrf.mxu0
    %v1098 = vadd.f32 %v1069, %v1097
    %v1099 = vpop.f32.mrf.mxu0
    %1100 = vdwg.mxu0
    %v1101 = vperm.slane %v31, 5
    %v1102 = vsub.f32 %v1098, %v1101
    %v1103 = vadd.f32 %v31, 1e-05
    %v1104 = vrsqrt.pop %v1103
    %v1105 = vmul.f32 %v1104, %v1103
    %v1106 = vmul.f32 %v1105, %v1104
    %v1107 = vmul.f32 0.5, %v1106
    %v1108 = vsub.f32 1.5, %v1107
    %v1109 = vmul.f32 %v1104, %v1108
    %vm1110 = vweird.f32 %v1103
    %vm1111 = vweird.f32 %v1104
    %vm1112 = vmor %vm1110, %vm1111
    %v1113 = vsel %vm1112, %v1104, %v1109
    %v1114 = vperm.slane %v1113, 6
    %v1115 = vmul.f32 %v1102, %v1114
    %v1116 = vperm.slane %v31, 3
    %v1117 = vmul.f32 %v1115, %v1116
    %v1118 = vperm.slane %v31, 4
    %v1119 = vadd.f32 %v1117, %v1118
    %v1120 = vmax.f32 %v1119, 0.0
    %v1121 = vpack.c.bf16 %v1120, %v1120
    %v1122 = vperm.slane %v31, 7
    %v1139 = vunpack.c.l.b16 %v57
    %v1140 = vunpack.c.l.b16 %v58
    %v1141 = vunpack.c.l.b16 %v59
    %v1142 = vunpack.c.l.b16 %v60
    %v1143 = vunpack.c.l.b16 %v61
    %v1144 = vunpack.c.l.b16 %v62
    %v1145 = vunpack.c.l.b16 %v63
    %v1146 = vunpack.c.l.b16 %v64
    %v1147 = vunpack.c.l.b16 %v65
    %v1148 = vunpack.c.l.b16 %v66
    %v1149 = vunpack.c.l.b16 %v67
    %v1150 = vunpack.c.l.b16 %v68
    %v1151 = vunpack.c.l.b16 %v69
    %v1152 = vunpack.c.l.b16 %v70
    %v1153 = vunpack.c.l.b16 %v71
    %v1154 = vunpack.c.l.b16 %v72
    %v1155 = vpack.c.b16 %v1140, %v1139
    %v1156 = vpack.c.b16 %v1142, %v1141
    %v1157 = vpack.c.b16 %v1144, %v1143
    %v1158 = vpack.c.b16 %v1146, %v1145
    %v1159 = vpack.c.b16 %v1148, %v1147
    %v1160 = vpack.c.b16 %v1150, %v1149
    %v1161 = vpack.c.b16 %v1152, %v1151
    %v1162 = vpack.c.b16 %v1154, %v1153
    %1171 = vmatpush.bf16.msra.mxu0 %v1162
    %1172 = vmatpush.bf16.msra.mxu0 %v1161
    %1173 = vmatpush.bf16.msra.mxu0 %v1160
    %1174 = vmatpush.bf16.msra.mxu0 %v1159
    %1175 = vmatpush.bf16.msra.mxu0 %v1158
    %1176 = vmatpush.bf16.msra.mxu0 %v1157
    %1177 = vmatpush.bf16.msra.mxu0 %v1156
    %1178 = vmatpush.bf16.msra.mxu0 %v1155
    %1179 = vmatmul.bf16.gmra.mxu0 %v1121
    %v1180 = vpop.f32.mrf.mxu0
    %v1181 = vadd.f32 %v1122, %v1180
    %v1182 = vpop.f32.mrf.mxu0
    %1183 = vdwg.mxu0
    %1184 = vst [vmem:[%s3] sm:$0xff] %v1181
    // Predicated region
    $region18: #{cnn_lstm_forward.1} parent=1 // pred_check
      _
    $region19: #{cnn_lstm_forward.1} parent=1 // pred_check_branch
      %1186 = sbr.rel (0) target = $region21
    $region20: #{cnn_lstm_forward.1} parent=1 // pred_region
      _
    $region21: #{cnn_lstm_forward.1} parent=1 // pred_fallthru
      _
    // Predicated region
    $region22: #{cnn_lstm_forward.1} parent=1 // pred_check
      _
    $region23: #{cnn_lstm_forward.1} parent=1 // pred_check_branch
      %1188 = sbr.rel (0) target = $region25
    $region24: #{cnn_lstm_forward.1} parent=1 // pred_region
      _
    $region25: #{cnn_lstm_forward.1} parent=1 // pred_fallthru
      _
    %1189 = vsyncpa [#allocation3], 1

</llo_original>
